<compile_context>
chip_gen: v5e
topology: v5e:2x2
jax: 0.10.0
libtpu: 0.0.40
codegen_flags: <defaults>
</compile_context>

<pallas_src>
import functools

import jax
import jax.numpy as jnp
from jax import lax
from jax.experimental import pallas as pl
from jax.experimental.pallas import tpu as pltpu


def _round_up(x, m):
    return (x + m - 1) // m * m


def _pick_row_tile(ho, target=8):
    """Largest divisor of ho that is <= target (keeps the grid even)."""
    for t in range(min(target, ho), 0, -1):
        if ho % t == 0:
            return t
    return 1


# ---------------------------------------------------------------------------
# Fused kernel: one grid step = one (batch image, output-row tile).
# The hidden (expanded) activation lives entirely in VMEM / vregs.
# ---------------------------------------------------------------------------
def _fused_kernel(*refs, has_expand, use_res, stride, tho, wo_p):
    if has_expand:
        (x_ref, w_exp_ref, w_dw_ref, b_dw_ref,
         w_prj_ref, b_prj_ref, o_ref) = refs
    else:
        (x_ref, w_dw_ref, b_dw_ref,
         w_prj_ref, b_prj_ref, o_ref) = refs

    x = x_ref[0]                                # (tin, wpad, cin_p)
    tin, wpad, cin_p = x.shape
    hid_p = w_dw_ref.shape[2]
    cout_p = o_ref.shape[3]

    # ---- 1x1 expand + folded BN + ReLU6 (bias rides on the constant-1
    #      input channel, so the zero-padded halo ring stays exactly 0) ------
    if has_expand:
        h2d = jnp.dot(x.reshape(tin * wpad, cin_p), w_exp_ref[...],
                      preferred_element_type=jnp.float32)
        h = jnp.clip(h2d, 0.0, 6.0).reshape(tin, wpad, hid_p)
    else:
        h = x.astype(jnp.float32)               # ring already zero

    # ---- 3x3 depthwise conv (scale folded into weights) + bias + ReLU6 ----
    # f32 VPU math (required on v5e, harmless elsewhere).
    acc = jnp.zeros((tho, wo_p, hid_p), jnp.float32)
    for ki in range(3):
        for kj in range(3):
            tap = h[ki:ki + stride * (tho - 1) + 1:stride,
                    kj:kj + stride * (wo_p - 1) + 1:stride, :]
            acc = acc + tap * w_dw_ref[ki, kj].astype(jnp.float32)
    y = jnp.clip(acc + b_dw_ref[...], 0.0, 6.0)

    # ---- 1x1 project (scale folded) + bias + fused residual add -----------
    out = jnp.dot(y.reshape(tho * wo_p, hid_p).astype(w_prj_ref.dtype),
                  w_prj_ref[...], preferred_element_type=jnp.float32)
    out = out + b_prj_ref[...]
    if use_res:
        res = x[1:1 + tho, 1:1 + wo_p, :cout_p].astype(jnp.float32)
        out = out + res.reshape(tho * wo_p, cout_p)
    o_ref[0] = out.reshape(tho, wo_p, cout_p).astype(o_ref.dtype)


# ---------------------------------------------------------------------------
# BN folding helper
# ---------------------------------------------------------------------------
def _fold_bn(gamma, beta, mean, var, eps=1e-5):
    scale = gamma / jnp.sqrt(var + eps)
    bias = beta - mean * scale
    return scale, bias


# ---------------------------------------------------------------------------
# Module: parameter init + forward
# ---------------------------------------------------------------------------
class InvertedResidualPallas:
    def __init__(self, inp, oup, stride, expand_ratio, key,
                 compute_dtype=jnp.float32):
        assert stride in (1, 2)
        self.inp, self.oup, self.stride = inp, oup, stride
        self.expand_ratio = expand_ratio
        self.hidden = int(round(inp * expand_ratio))
        self.use_res_connect = (stride == 1 and inp == oup)
        self.compute_dtype = compute_dtype      # set to jnp.bfloat16 on v6e/v7x

        f32 = jnp.float32
        keys = jax.random.split(key, 6)

        def bn_params(k, c):
            k1, k2, k3, k4 = jax.random.split(k, 4)
            gamma = 1.0 + 0.1 * jax.random.normal(k1, (c,), f32)
            beta = 0.1 * jax.random.normal(k2, (c,), f32)
            mean = 0.1 * jax.random.normal(k3, (c,), f32)
            var = 0.5 + jnp.abs(0.2 * jax.random.normal(k4, (c,), f32))
            return gamma, beta, mean, var

        # ----- raw (unpadded) parameters, also used by the XLA reference ----
        if expand_ratio != 1:
            self.w_expand = 0.2 * jax.random.normal(keys[0], (inp, self.hidden), f32)
            self.expand_scale, self.expand_bias = _fold_bn(*bn_params(keys[1], self.hidden))
        self.w_dw = 0.2 * jax.random.normal(keys[2], (3, 3, self.hidden), f32)
        self.dw_scale, self.dw_bias = _fold_bn(*bn_params(keys[3], self.hidden))
        self.w_proj = 0.2 * jax.random.normal(keys[4], (self.hidden, oup), f32)
        self.proj_scale, self.proj_bias = _fold_bn(*bn_params(keys[5], oup))

        # ----- padded + BN-folded parameters for the fused kernel -----------
        # Channel dims padded to multiples of 128 (lane-dense loads/stores and
        # full MXU tiles).  One extra constant-1 input channel carries the
        # expand-BN bias so the zero-padded halo stays zero after ReLU6.
        extra = 1 if expand_ratio != 1 else 0
        self.cin_p = _round_up(inp + extra, 128)
        self.hid_p = _round_up(self.hidden, 128)
        self.cout_p = _round_up(oup, 128)

        if expand_ratio != 1:
            w_aug = jnp.zeros((self.cin_p, self.hid_p), f32)
            w_aug = w_aug.at[:inp, :self.hidden].set(
                self.w_expand * self.expand_scale[None, :])
            w_aug = w_aug.at[inp, :self.hidden].set(self.expand_bias)
            self.w_expand_p = w_aug.astype(compute_dtype)

        self.w_dw_p = (jnp.zeros((3, 3, self.hid_p), f32)
                       .at[:, :, :self.hidden]
                       .set(self.w_dw * self.dw_scale[None, None, :])
                       .astype(compute_dtype))
        self.b_dw_p = (jnp.zeros((1, 1, self.hid_p), f32)
                       .at[0, 0, :self.hidden].set(self.dw_bias))
        self.w_proj_p = (jnp.zeros((self.hid_p, self.cout_p), f32)
                         .at[:self.hidden, :oup]
                         .set(self.w_proj * self.proj_scale[None, :])
                         .astype(compute_dtype))
        self.b_prj_p = (jnp.zeros((1, self.cout_p), f32)
                        .at[0, :oup].set(self.proj_bias))

        # jit the whole forward so the boundary transpose / pad / halo-gather
        # fuse into a single XLA pass around the fused Pallas kernel.
        self._forward = jax.jit(self._forward_impl)

    # -----------------------------------------------------------------------
    def __call__(self, x_nchw):
        return self._forward(x_nchw)

    def _forward_impl(self, x_nchw):
        N, Cin, H, W = x_nchw.shape
        assert Cin == self.inp
        s = self.stride
        Ho = (H - 1) // s + 1
        Wo = (W - 1) // s + 1

        tho = _pick_row_tile(Ho)                     # output rows per grid step
        nR = Ho // tho
        tin = s * (tho - 1) + 3                      # input rows incl. 1-px halo
        wo_p = _round_up(Wo, 8)                      # sublane-aligned tile width
        wpad = _round_up(max(W + 2, s * (wo_p - 1) + 3), 8)

        x = jnp.transpose(x_nchw, (0, 2, 3, 1))      # NCHW -> NHWC
        if self.expand_ratio != 1:                   # constant-1 bias channel
            x = jnp.concatenate([x, jnp.ones((N, H, W, 1), x.dtype)], axis=-1)
        c_now = x.shape[-1]
        # zero-pad: 1-px conv halo (H, W) + lane padding (C).  Only the narrow
        # input tensor is padded; the wide hidden tensor never hits HBM.
        xp = jnp.pad(x, ((0, 0), (1, 1), (1, wpad - W - 1),
                         (0, self.cin_p - c_now))).astype(self.compute_dtype)

        # pre-gather overlapping row tiles (output-row tile + 1-px halo)
        row_idx = (jnp.arange(nR) * (s * tho))[:, None] + jnp.arange(tin)[None, :]
        x_ov = xp[:, row_idx].reshape(N * nR, tin, wpad, self.cin_p)

        in_specs = [pl.BlockSpec((1, tin, wpad, self.cin_p),
                                 lambda n, r: (n * nR + r, 0, 0, 0))]
        args = [x_ov]
        if self.expand_ratio != 1:
            in_specs.append(pl.BlockSpec((self.cin_p, self.hid_p),
                                         lambda n, r: (0, 0)))
            args.append(self.w_expand_p)
        in_specs += [
            pl.BlockSpec((3, 3, self.hid_p), lambda n, r: (0, 0, 0)),
            pl.BlockSpec((1, 1, self.hid_p), lambda n, r: (0, 0, 0)),
            pl.BlockSpec((self.hid_p, self.cout_p), lambda n, r: (0, 0)),
            pl.BlockSpec((1, self.cout_p), lambda n, r: (0, 0)),
        ]
        args += [self.w_dw_p, self.b_dw_p, self.w_proj_p, self.b_prj_p]

        kernel = functools.partial(
            _fused_kernel, has_expand=self.expand_ratio != 1,
            use_res=self.use_res_connect, stride=s, tho=tho, wo_p=wo_p)

        out = pl.pallas_call(
            kernel,
            out_shape=jax.ShapeDtypeStruct((N, Ho, wo_p, self.cout_p),
                                           x_nchw.dtype),
            grid_spec=pltpu.PrefetchScalarGridSpec(
                num_scalar_prefetch=0,
                grid=(N, nR),
                in_specs=in_specs,
                out_specs=pl.BlockSpec((1, tho, wo_p, self.cout_p),
                                       lambda n, r: (n, r, 0, 0)),
            ),
            compiler_params=pltpu.CompilerParams(
                dimension_semantics=("parallel", "parallel"),
                # lift the conservative default scoped-VMEM limit while leaving
                # headroom for v7x's 64 MiB physical VMEM
                vmem_limit_bytes=48 * 1024 * 1024),
        )(*args)

        out = out[:, :, :Wo, :self.oup]              # drop lane / width padding
        return jnp.transpose(out, (0, 3, 1, 2))      # NHWC -> NCHW

    # -----------------------------------------------------------------------
    # Pure-JAX reference (XLA convs, unpadded params) for correctness checks.
    def reference(self, x_nchw):
        x = jnp.transpose(x_nchw, (0, 2, 3, 1))
        dn = ("NHWC", "HWIO", "NHWC")
        h = x
        if self.expand_ratio != 1:
            w = self.w_expand.reshape(1, 1, self.inp, self.hidden)
            h = lax.conv_general_dilated(h, w, (1, 1), "VALID", dimension_numbers=dn)
            h = jnp.clip(h * self.expand_scale + self.expand_bias, 0.0, 6.0)
        wd = self.w_dw.reshape(3, 3, 1, self.hidden)
        h = lax.conv_general_dilated(h, wd, (self.stride, self.stride),
                                     [(1, 1), (1, 1)], dimension_numbers=dn,
                                     feature_group_count=self.hidden)
        h = jnp.clip(h * self.dw_scale + self.dw_bias, 0.0, 6.0)
        wp = self.w_proj.reshape(1, 1, self.hidden, self.oup)
        h = lax.conv_general_dilated(h, wp, (1, 1), "VALID", dimension_numbers=dn)
        h = h * self.proj_scale + self.proj_bias
        if self.use_res_connect:
            h = h + x
        return jnp.transpose(h, (0, 3, 1, 2))


if __name__ == "__main__":
    key = jax.random.PRNGKey(0)
    configs = [
        # (inp, oup, stride, expand_ratio, H, W)
        (4, 4, 1, 6, 16, 16),   # expand path + residual connection
        (4, 8, 2, 6, 16, 16),   # expand path, stride 2, no residual
        (8, 8, 1, 1, 16, 16),   # no-expand path + residual connection
    ]
    for i, (inp, oup, stride, er, H, W) in enumerate(configs):
        k_param, k_x, key = jax.random.split(key, 3)
        block = InvertedResidualPallas(inp, oup, stride, er, k_param)
        x = jax.random.normal(k_x, (2, inp, H, W), jnp.float32)  # NCHW like PyTorch

        out = jax.block_until_ready(block(x))
        ref = jax.block_until_ready(block.reference(x))

        assert out.shape == ref.shape, f"config {i}: {out.shape} vs {ref.shape}"
        err = jnp.max(jnp.abs(out - ref))
        assert jnp.allclose(out, ref, rtol=2e-4, atol=2e-4), \
            f"config {i}: max err {err}"

    print("KERNEL_OK")
</pallas_src>

<mosaic_0001>
module attributes {stable_mosaic.version = 11 : i64} {
  func.func @_fused_kernel(%arg0: i32, %arg1: i32, %arg2: memref<1x10x24x128xf32, #tpu.memory_space<vmem>>, %arg3: memref<128x128xf32, #tpu.memory_space<vmem>>, %arg4: memref<3x3x128xf32, #tpu.memory_space<vmem>>, %arg5: memref<1x1x128xf32, #tpu.memory_space<vmem>>, %arg6: memref<128x128xf32, #tpu.memory_space<vmem>>, %arg7: memref<1x128xf32, #tpu.memory_space<vmem>>, %arg8: memref<1x8x16x128xf32, #tpu.memory_space<vmem>>) attributes {dimension_semantics = [#tpu.dimension_semantics<parallel>, #tpu.dimension_semantics<parallel>], iteration_bounds = array<i64: 2, 2>, scalar_prefetch = 0 : i64, scratch_operands = 0 : i64, tpu.core_type = #tpu.core_type<tc>, window_params = [{transform_indices = @transform_0, window_bounds = array<i64: 1, 10, 24, 128>}, {pipeline_mode = #tpu.pipeline_mode<synchronous>, transform_indices = @transform_1, window_bounds = array<i64: 128, 128>}, {pipeline_mode = #tpu.pipeline_mode<synchronous>, transform_indices = @transform_2, window_bounds = array<i64: 3, 3, 128>}, {pipeline_mode = #tpu.pipeline_mode<synchronous>, transform_indices = @transform_3, window_bounds = array<i64: 1, 1, 128>}, {pipeline_mode = #tpu.pipeline_mode<synchronous>, transform_indices = @transform_4, window_bounds = array<i64: 128, 128>}, {pipeline_mode = #tpu.pipeline_mode<synchronous>, transform_indices = @transform_5, window_bounds = array<i64: 1, 128>}, {transform_indices = @transform_6, window_bounds = array<i64: 1, 8, 16, 128>}]} {
    %c0 = arith.constant 0 : index
    %c0_0 = arith.constant 0 : index
    %c0_1 = arith.constant 0 : index
    %c0_2 = arith.constant 0 : index
    %0 = vector.load %arg2[%c0, %c0_0, %c0_1, %c0_2] : memref<1x10x24x128xf32, #tpu.memory_space<vmem>>, vector<1x10x24x128xf32>
    %1 = vector.shape_cast %0 : vector<1x10x24x128xf32> to vector<10x24x128xf32>
    %2 = vector.shape_cast %1 : vector<10x24x128xf32> to vector<240x128xf32>
    %c0_3 = arith.constant 0 : index
    %c0_4 = arith.constant 0 : index
    %3 = vector.load %arg3[%c0_3, %c0_4] : memref<128x128xf32, #tpu.memory_space<vmem>>, vector<128x128xf32>
    %cst = arith.constant dense<0.000000e+00> : vector<240x128xf32>
    %4 = tpu.matmul %2, %3, %cst {dimension_numbers = #tpu.dot_dimension_numbers<[1], [0], [0], [1], [0, 0, 1, 1], [], []>} : vector<240x128xf32>, vector<128x128xf32>, vector<240x128xf32> -> vector<240x128xf32>
    %cst_5 = arith.constant 0.000000e+00 : f32
    %cst_6 = arith.constant 6.000000e+00 : f32
    %5 = vector.broadcast %cst_5 : f32 to vector<240x128xf32>
    %6 = arith.maximumf %5, %4 : vector<240x128xf32>
    %7 = vector.broadcast %cst_6 : f32 to vector<240x128xf32>
    %8 = arith.minimumf %7, %6 : vector<240x128xf32>
    %9 = vector.shape_cast %8 : vector<240x128xf32> to vector<10x24x128xf32>
    %cst_7 = arith.constant 0.000000e+00 : f32
    %10 = vector.broadcast %cst_7 : f32 to vector<8x16x128xf32>
    %11 = vector.extract_strided_slice %9 {offsets = [0, 0, 0], sizes = [8, 16, 128], strides = [1, 1, 1]} : vector<10x24x128xf32> to vector<8x16x128xf32>
    %c0_8 = arith.constant 0 : index
    %c0_9 = arith.constant 0 : index
    %c0_10 = arith.constant 0 : index
    %12 = vector.load %arg4[%c0_8, %c0_9, %c0_10] : memref<3x3x128xf32, #tpu.memory_space<vmem>>, vector<1x1x128xf32>
    %13 = vector.shape_cast %12 : vector<1x1x128xf32> to vector<128xf32>
    %14 = vector.shape_cast %13 : vector<128xf32> to vector<1x1x128xf32>
    %15 = vector.broadcast %14 : vector<1x1x128xf32> to vector<8x16x128xf32>
    %16 = arith.mulf %11, %15 : vector<8x16x128xf32>
    %17 = arith.addf %10, %16 : vector<8x16x128xf32>
    %18 = vector.extract_strided_slice %9 {offsets = [0, 1, 0], sizes = [8, 16, 128], strides = [1, 1, 1]} : vector<10x24x128xf32> to vector<8x16x128xf32>
    %c0_11 = arith.constant 0 : index
    %c1 = arith.constant 1 : index
    %c0_12 = arith.constant 0 : index
    %19 = vector.load %arg4[%c0_11, %c1, %c0_12] : memref<3x3x128xf32, #tpu.memory_space<vmem>>, vector<1x1x128xf32>
    %20 = vector.shape_cast %19 : vector<1x1x128xf32> to vector<128xf32>
    %21 = vector.shape_cast %20 : vector<128xf32> to vector<1x1x128xf32>
    %22 = vector.broadcast %21 : vector<1x1x128xf32> to vector<8x16x128xf32>
    %23 = arith.mulf %18, %22 : vector<8x16x128xf32>
    %24 = arith.addf %17, %23 : vector<8x16x128xf32>
    %25 = vector.extract_strided_slice %9 {offsets = [0, 2, 0], sizes = [8, 16, 128], strides = [1, 1, 1]} : vector<10x24x128xf32> to vector<8x16x128xf32>
    %c0_13 = arith.constant 0 : index
    %c2 = arith.constant 2 : index
    %c0_14 = arith.constant 0 : index
    %26 = vector.load %arg4[%c0_13, %c2, %c0_14] : memref<3x3x128xf32, #tpu.memory_space<vmem>>, vector<1x1x128xf32>
    %27 = vector.shape_cast %26 : vector<1x1x128xf32> to vector<128xf32>
    %28 = vector.shape_cast %27 : vector<128xf32> to vector<1x1x128xf32>
    %29 = vector.broadcast %28 : vector<1x1x128xf32> to vector<8x16x128xf32>
    %30 = arith.mulf %25, %29 : vector<8x16x128xf32>
    %31 = arith.addf %24, %30 : vector<8x16x128xf32>
    %32 = vector.extract_strided_slice %9 {offsets = [1, 0, 0], sizes = [8, 16, 128], strides = [1, 1, 1]} : vector<10x24x128xf32> to vector<8x16x128xf32>
    %c1_15 = arith.constant 1 : index
    %c0_16 = arith.constant 0 : index
    %c0_17 = arith.constant 0 : index
    %33 = vector.load %arg4[%c1_15, %c0_16, %c0_17] : memref<3x3x128xf32, #tpu.memory_space<vmem>>, vector<1x1x128xf32>
    %34 = vector.shape_cast %33 : vector<1x1x128xf32> to vector<128xf32>
    %35 = vector.shape_cast %34 : vector<128xf32> to vector<1x1x128xf32>
    %36 = vector.broadcast %35 : vector<1x1x128xf32> to vector<8x16x128xf32>
    %37 = arith.mulf %32, %36 : vector<8x16x128xf32>
    %38 = arith.addf %31, %37 : vector<8x16x128xf32>
    %39 = vector.extract_strided_slice %9 {offsets = [1, 1, 0], sizes = [8, 16, 128], strides = [1, 1, 1]} : vector<10x24x128xf32> to vector<8x16x128xf32>
    %c1_18 = arith.constant 1 : index
    %c1_19 = arith.constant 1 : index
    %c0_20 = arith.constant 0 : index
    %40 = vector.load %arg4[%c1_18, %c1_19, %c0_20] : memref<3x3x128xf32, #tpu.memory_space<vmem>>, vector<1x1x128xf32>
    %41 = vector.shape_cast %40 : vector<1x1x128xf32> to vector<128xf32>
    %42 = vector.shape_cast %41 : vector<128xf32> to vector<1x1x128xf32>
    %43 = vector.broadcast %42 : vector<1x1x128xf32> to vector<8x16x128xf32>
    %44 = arith.mulf %39, %43 : vector<8x16x128xf32>
    %45 = arith.addf %38, %44 : vector<8x16x128xf32>
    %46 = vector.extract_strided_slice %9 {offsets = [1, 2, 0], sizes = [8, 16, 128], strides = [1, 1, 1]} : vector<10x24x128xf32> to vector<8x16x128xf32>
    %c1_21 = arith.constant 1 : index
    %c2_22 = arith.constant 2 : index
    %c0_23 = arith.constant 0 : index
    %47 = vector.load %arg4[%c1_21, %c2_22, %c0_23] : memref<3x3x128xf32, #tpu.memory_space<vmem>>, vector<1x1x128xf32>
    %48 = vector.shape_cast %47 : vector<1x1x128xf32> to vector<128xf32>
    %49 = vector.shape_cast %48 : vector<128xf32> to vector<1x1x128xf32>
    %50 = vector.broadcast %49 : vector<1x1x128xf32> to vector<8x16x128xf32>
    %51 = arith.mulf %46, %50 : vector<8x16x128xf32>
    %52 = arith.addf %45, %51 : vector<8x16x128xf32>
    %53 = vector.extract_strided_slice %9 {offsets = [2, 0, 0], sizes = [8, 16, 128], strides = [1, 1, 1]} : vector<10x24x128xf32> to vector<8x16x128xf32>
    %c2_24 = arith.constant 2 : index
    %c0_25 = arith.constant 0 : index
    %c0_26 = arith.constant 0 : index
    %54 = vector.load %arg4[%c2_24, %c0_25, %c0_26] : memref<3x3x128xf32, #tpu.memory_space<vmem>>, vector<1x1x128xf32>
    %55 = vector.shape_cast %54 : vector<1x1x128xf32> to vector<128xf32>
    %56 = vector.shape_cast %55 : vector<128xf32> to vector<1x1x128xf32>
    %57 = vector.broadcast %56 : vector<1x1x128xf32> to vector<8x16x128xf32>
    %58 = arith.mulf %53, %57 : vector<8x16x128xf32>
    %59 = arith.addf %52, %58 : vector<8x16x128xf32>
    %60 = vector.extract_strided_slice %9 {offsets = [2, 1, 0], sizes = [8, 16, 128], strides = [1, 1, 1]} : vector<10x24x128xf32> to vector<8x16x128xf32>
    %c2_27 = arith.constant 2 : index
    %c1_28 = arith.constant 1 : index
    %c0_29 = arith.constant 0 : index
    %61 = vector.load %arg4[%c2_27, %c1_28, %c0_29] : memref<3x3x128xf32, #tpu.memory_space<vmem>>, vector<1x1x128xf32>
    %62 = vector.shape_cast %61 : vector<1x1x128xf32> to vector<128xf32>
    %63 = vector.shape_cast %62 : vector<128xf32> to vector<1x1x128xf32>
    %64 = vector.broadcast %63 : vector<1x1x128xf32> to vector<8x16x128xf32>
    %65 = arith.mulf %60, %64 : vector<8x16x128xf32>
    %66 = arith.addf %59, %65 : vector<8x16x128xf32>
    %67 = vector.extract_strided_slice %9 {offsets = [2, 2, 0], sizes = [8, 16, 128], strides = [1, 1, 1]} : vector<10x24x128xf32> to vector<8x16x128xf32>
    %c2_30 = arith.constant 2 : index
    %c2_31 = arith.constant 2 : index
    %c0_32 = arith.constant 0 : index
    %68 = vector.load %arg4[%c2_30, %c2_31, %c0_32] : memref<3x3x128xf32, #tpu.memory_space<vmem>>, vector<1x1x128xf32>
    %69 = vector.shape_cast %68 : vector<1x1x128xf32> to vector<128xf32>
    %70 = vector.shape_cast %69 : vector<128xf32> to vector<1x1x128xf32>
    %71 = vector.broadcast %70 : vector<1x1x128xf32> to vector<8x16x128xf32>
    %72 = arith.mulf %67, %71 : vector<8x16x128xf32>
    %73 = arith.addf %66, %72 : vector<8x16x128xf32>
    %c0_33 = arith.constant 0 : index
    %c0_34 = arith.constant 0 : index
    %c0_35 = arith.constant 0 : index
    %74 = vector.load %arg5[%c0_33, %c0_34, %c0_35] : memref<1x1x128xf32, #tpu.memory_space<vmem>>, vector<1x1x128xf32>
    %75 = vector.broadcast %74 : vector<1x1x128xf32> to vector<8x16x128xf32>
    %76 = arith.addf %73, %75 : vector<8x16x128xf32>
    %cst_36 = arith.constant 0.000000e+00 : f32
    %cst_37 = arith.constant 6.000000e+00 : f32
    %77 = vector.broadcast %cst_36 : f32 to vector<8x16x128xf32>
    %78 = arith.maximumf %77, %76 : vector<8x16x128xf32>
    %79 = vector.broadcast %cst_37 : f32 to vector<8x16x128xf32>
    %80 = arith.minimumf %79, %78 : vector<8x16x128xf32>
    %81 = vector.shape_cast %80 : vector<8x16x128xf32> to vector<128x128xf32>
    %c0_38 = arith.constant 0 : index
    %c0_39 = arith.constant 0 : index
    %82 = vector.load %arg6[%c0_38, %c0_39] : memref<128x128xf32, #tpu.memory_space<vmem>>, vector<128x128xf32>
    %cst_40 = arith.constant dense<0.000000e+00> : vector<128x128xf32>
    %83 = tpu.matmul %81, %82, %cst_40 {dimension_numbers = #tpu.dot_dimension_numbers<[1], [0], [0], [1], [0, 0, 1, 1], [], []>} : vector<128x128xf32>, vector<128x128xf32>, vector<128x128xf32> -> vector<128x128xf32>
    %c0_41 = arith.constant 0 : index
    %c0_42 = arith.constant 0 : index
    %84 = vector.load %arg7[%c0_41, %c0_42] : memref<1x128xf32, #tpu.memory_space<vmem>>, vector<1x128xf32>
    %85 = vector.broadcast %84 : vector<1x128xf32> to vector<128x128xf32>
    %86 = arith.addf %83, %85 : vector<128x128xf32>
    %87 = vector.extract_strided_slice %1 {offsets = [1, 1, 0], sizes = [8, 16, 128], strides = [1, 1, 1]} : vector<10x24x128xf32> to vector<8x16x128xf32>
    %88 = vector.shape_cast %87 : vector<8x16x128xf32> to vector<128x128xf32>
    %89 = arith.addf %86, %88 : vector<128x128xf32>
    %90 = vector.shape_cast %89 : vector<128x128xf32> to vector<8x16x128xf32>
    %c0_43 = arith.constant 0 : index
    %c0_44 = arith.constant 0 : index
    %c0_45 = arith.constant 0 : index
    %c0_46 = arith.constant 0 : index
    %91 = vector.load %arg8[%c0_43, %c0_44, %c0_45, %c0_46] : memref<1x8x16x128xf32, #tpu.memory_space<vmem>>, vector<1x8x16x128xf32>
    %92 = vector.shape_cast %91 : vector<1x8x16x128xf32> to vector<8x16x128xf32>
    %93 = vector.shape_cast %90 : vector<8x16x128xf32> to vector<1x8x16x128xf32>
    tpu.vector_store %arg8[%c0_43, %c0_44, %c0_45, %c0_46], %93 {strides = array<i32>} : memref<1x8x16x128xf32, #tpu.memory_space<vmem>>, vector<1x8x16x128xf32>,
    return
  }
  func.func @transform_0(%arg0: i32, %arg1: i32) -> (i32, i32, i32, i32) {
    %c2_i32 = arith.constant 2 : i32
    %0 = arith.muli %arg0, %c2_i32 : i32
    %1 = arith.addi %0, %arg1 : i32
    %c0_i32 = arith.constant 0 : i32
    %c0_i32_0 = arith.constant 0 : i32
    %c0_i32_1 = arith.constant 0 : i32
    %c0_i32_2 = arith.constant 0 : i32
    return %1, %c0_i32, %c0_i32_0, %c0_i32_1 : i32, i32, i32, i32
  }
  func.func @transform_1(%arg0: i32, %arg1: i32) -> (i32, i32) {
    %c0_i32 = arith.constant 0 : i32
    %c0_i32_0 = arith.constant 0 : i32
    %c0_i32_1 = arith.constant 0 : i32
    return %c0_i32, %c0_i32_0 : i32, i32
  }
  func.func @transform_2(%arg0: i32, %arg1: i32) -> (i32, i32, i32) {
    %c0_i32 = arith.constant 0 : i32
    %c0_i32_0 = arith.constant 0 : i32
    %c0_i32_1 = arith.constant 0 : i32
    %c0_i32_2 = arith.constant 0 : i32
    return %c0_i32, %c0_i32_0, %c0_i32_1 : i32, i32, i32
  }
  func.func @transform_3(%arg0: i32, %arg1: i32) -> (i32, i32, i32) {
    %c0_i32 = arith.constant 0 : i32
    %c0_i32_0 = arith.constant 0 : i32
    %c0_i32_1 = arith.constant 0 : i32
    %c0_i32_2 = arith.constant 0 : i32
    return %c0_i32, %c0_i32_0, %c0_i32_1 : i32, i32, i32
  }
  func.func @transform_4(%arg0: i32, %arg1: i32) -> (i32, i32) {
    %c0_i32 = arith.constant 0 : i32
    %c0_i32_0 = arith.constant 0 : i32
    %c0_i32_1 = arith.constant 0 : i32
    return %c0_i32, %c0_i32_0 : i32, i32
  }
  func.func @transform_5(%arg0: i32, %arg1: i32) -> (i32, i32) {
    %c0_i32 = arith.constant 0 : i32
    %c0_i32_0 = arith.constant 0 : i32
    %c0_i32_1 = arith.constant 0 : i32
    return %c0_i32, %c0_i32_0 : i32, i32
  }
  func.func @transform_6(%arg0: i32, %arg1: i32) -> (i32, i32, i32, i32) {
    %c0_i32 = arith.constant 0 : i32
    %c0_i32_0 = arith.constant 0 : i32
    %c0_i32_1 = arith.constant 0 : i32
    return %arg0, %arg1, %c0_i32, %c0_i32_0 : i32, i32, i32, i32
  }
}

</mosaic_0001>

<llo_original>
// kernel: _forward_impl.1
$region0: #{_forward_impl.1}
  #allocation0 [shape = 'u32[]', space=smem, size = 0x4, offset = 0x4, fixed_abs, tag = 'smem constant byte address 0x4 - core index']
  #allocation1 [shape = 'u32[72,128]{1,0:T(1,128)}', space=vmem, size = 0x9000, scoped, tag = 'internal scratch']
  %s0 = inlined_call_operand.vmem [shape: f32[4,10,24,128], index: 0, kind: input, shape index: {}]
  %s1 = inlined_call_operand.vmem [shape: f32[128,128], index: 1, kind: input, shape index: {}]
  %s2 = inlined_call_operand.vmem [shape: f32[3,3,128], index: 2, kind: input, shape index: {}]
  %s3 = inlined_call_operand.vmem [shape: f32[1,1,128], index: 3, kind: input, shape index: {}]
  %s4 = inlined_call_operand.vmem [shape: f32[128,128], index: 4, kind: input, shape index: {}]
  %s5 = inlined_call_operand.vmem [shape: f32[1,128], index: 5, kind: input, shape index: {}]
  %s6 = inlined_call_operand.vmem [shape: f32[2,16,16,128], index: 6, kind: output, shape index: {}]
  %s7 = sld [smem:[#allocation0]]
  $region57: #{_forward_impl.1} parent=0
    _
  %s9 = ssub.s32 1, %s7
  %s10 = scalar_select 0, %s9, %s7
  loop: start=0, step=1, limit=6
  $region2: #{_forward_impl.1} parent=0 // loop_pre_header
    _
  $region3: #{_forward_impl.1} parent=0 // loop_header
    %s12 = sphi 0, %s16
    %p13 = scmp.ge.s32.totalorder %s12, 6
    %s19 = sphi 0, %s31
    %s20 = sphi 0, %s27
    %s21 = sphi 0, %s19
    %s22 = sphi 0, %s20
    %s23 = sphi 0, %s21
    %s24 = sphi 0, %s22
    %s38 = sphi 0, %s40
    %s41 = sphi 0, %s38
    %s42 = sphi 0, %s41
    %s58 = sphi 0, %s42
    %s62 = sphi 0, %s62
    %s64 = sphi 0, %s62
    %s65 = sphi 0, %s64
    %s79 = sphi 0, %s65
    %s83 = sphi 0, %s83
    %s85 = sphi 0, %s83
    %s86 = sphi 0, %s85
    %s100 = sphi 0, %s86
    %s104 = sphi 0, %s104
    %s106 = sphi 0, %s104
    %s107 = sphi 0, %s106
    %s121 = sphi 0, %s107
    %s125 = sphi 0, %s125
    %s127 = sphi 0, %s125
    %s128 = sphi 0, %s127
    %s142 = sphi 0, %s128
    %s146 = sphi 0, %s146
    %s148 = sphi 0, %s146
    %s149 = sphi 0, %s148
    %s163 = sphi 0, %s149
    %s171 = sphi 0, %s173
    %s174 = sphi 0, %s171
    %s175 = sphi 0, %s174
    %s191 = sphi 0, %s175
  $region4: #{_forward_impl.1} parent=0 // loop_header_branch
    %15 = sbr.rel (%p13) target = $region8
  $region5: #{_forward_impl.1} parent=0 // loop_body
    %s17 = ssub.s32 %s12, 1
    %s18 = ssub.s32 %s12, 2
    %s25 = sadd.s32 1, %s20
    %p26 = scmp.ge.s32.totalorder %s25, 2
    %s27 = scalar_select %p26, 0, %s25
    %s28 = sadd.s32 1, %s19
    %s29 = scalar_select %p26, %s28, %s19
    %p30 = scmp.ge.s32.totalorder %s29, 2
    %s31 = scalar_select %p30, 0, %s29
    %s32 = smul.u32 %s19, 2
    %s33 = sadd.s32 %s32, %s20
    %s34 = smul.u32 %s31, 2
    %s35 = sadd.s32 %s34, %s27
    %s36 = ssub.s32 %s33, %s35
    %p37 = scmp.eq.s32.totalorder %s36, 0
    %s39 = sadd.s32 %s38, 1
    %s40 = scalar_select %p37, %s38, %s39
    %p43 = pneg %p37
    %p44 = scmp.eq.s32.totalorder %s12, 3
    %p45 = por %p43, %p44
    %p46 = scmp.ne.s32.totalorder %s38, %s41
    %p47 = scmp.eq.s32.totalorder %s12, 0
    %p48 = por %p46, %p47
    %p49 = scmp.ne.s32.totalorder %s38, %s41
    %p50 = scmp.eq.s32.totalorder %s17, 3
    %p51 = por %p49, %p50
    %p52 = scmp.ne.s32.totalorder %s41, %s42
    %p53 = scmp.eq.s32.totalorder %s17, 0
    %p54 = por %p52, %p53
    %p55 = scmp.ne.s32.totalorder %s41, %s42
    %p56 = scmp.eq.s32.totalorder %s18, 3
    %p57 = por %p55, %p56
    %p59 = scmp.ne.s32.totalorder %s42, %s58
    %p60 = scmp.eq.s32.totalorder %s18, 0
    %p61 = por %p59, %p60
    %s63 = sadd.s32 %s62, 1
    %p66 = scmp.eq.s32.totalorder %s12, 3
    %p67 = scmp.ne.s32.totalorder %s62, %s64
    %p68 = scmp.eq.s32.totalorder %s12, 0
    %p69 = por %p67, %p68
    %p70 = scmp.ne.s32.totalorder %s62, %s64
    %p71 = scmp.eq.s32.totalorder %s17, 3
    %p72 = por %p70, %p71
    %p73 = scmp.ne.s32.totalorder %s64, %s65
    %p74 = scmp.eq.s32.totalorder %s17, 0
    %p75 = por %p73, %p74
    %p76 = scmp.ne.s32.totalorder %s64, %s65
    %p77 = scmp.eq.s32.totalorder %s18, 3
    %p78 = por %p76, %p77
    %p80 = scmp.ne.s32.totalorder %s65, %s79
    %p81 = scmp.eq.s32.totalorder %s18, 0
    %p82 = por %p80, %p81
    %s84 = sadd.s32 %s83, 1
    %p87 = scmp.eq.s32.totalorder %s12, 3
    %p88 = scmp.ne.s32.totalorder %s83, %s85
    %p89 = scmp.eq.s32.totalorder %s12, 0
    %p90 = por %p88, %p89
    %p91 = scmp.ne.s32.totalorder %s83, %s85
    %p92 = scmp.eq.s32.totalorder %s17, 3
    %p93 = por %p91, %p92
    %p94 = scmp.ne.s32.totalorder %s85, %s86
    %p95 = scmp.eq.s32.totalorder %s17, 0
    %p96 = por %p94, %p95
    %p97 = scmp.ne.s32.totalorder %s85, %s86
    %p98 = scmp.eq.s32.totalorder %s18, 3
    %p99 = por %p97, %p98
    %p101 = scmp.ne.s32.totalorder %s86, %s100
    %p102 = scmp.eq.s32.totalorder %s18, 0
    %p103 = por %p101, %p102
    %s105 = sadd.s32 %s104, 1
    %p108 = scmp.eq.s32.totalorder %s12, 3
    %p109 = scmp.ne.s32.totalorder %s104, %s106
    %p110 = scmp.eq.s32.totalorder %s12, 0
    %p111 = por %p109, %p110
    %p112 = scmp.ne.s32.totalorder %s104, %s106
    %p113 = scmp.eq.s32.totalorder %s17, 3
    %p114 = por %p112, %p113
    %p115 = scmp.ne.s32.totalorder %s106, %s107
    %p116 = scmp.eq.s32.totalorder %s17, 0
    %p117 = por %p115, %p116
    %p118 = scmp.ne.s32.totalorder %s106, %s107
    %p119 = scmp.eq.s32.totalorder %s18, 3
    %p120 = por %p118, %p119
    %p122 = scmp.ne.s32.totalorder %s107, %s121
    %p123 = scmp.eq.s32.totalorder %s18, 0
    %p124 = por %p122, %p123
    %s126 = sadd.s32 %s125, 1
    %p129 = scmp.eq.s32.totalorder %s12, 3
    %p130 = scmp.ne.s32.totalorder %s125, %s127
    %p131 = scmp.eq.s32.totalorder %s12, 0
    %p132 = por %p130, %p131
    %p133 = scmp.ne.s32.totalorder %s125, %s127
    %p134 = scmp.eq.s32.totalorder %s17, 3
    %p135 = por %p133, %p134
    %p136 = scmp.ne.s32.totalorder %s127, %s128
    %p137 = scmp.eq.s32.totalorder %s17, 0
    %p138 = por %p136, %p137
    %p139 = scmp.ne.s32.totalorder %s127, %s128
    %p140 = scmp.eq.s32.totalorder %s18, 3
    %p141 = por %p139, %p140
    %p143 = scmp.ne.s32.totalorder %s128, %s142
    %p144 = scmp.eq.s32.totalorder %s18, 0
    %p145 = por %p143, %p144
    %s147 = sadd.s32 %s146, 1
    %p150 = scmp.eq.s32.totalorder %s12, 3
    %p151 = scmp.ne.s32.totalorder %s146, %s148
    %p152 = scmp.eq.s32.totalorder %s12, 0
    %p153 = por %p151, %p152
    %p154 = scmp.ne.s32.totalorder %s146, %s148
    %p155 = scmp.eq.s32.totalorder %s17, 3
    %p156 = por %p154, %p155
    %p157 = scmp.ne.s32.totalorder %s148, %s149
    %p158 = scmp.eq.s32.totalorder %s17, 0
    %p159 = por %p157, %p158
    %p160 = scmp.ne.s32.totalorder %s148, %s149
    %p161 = scmp.eq.s32.totalorder %s18, 3
    %p162 = por %p160, %p161
    %p164 = scmp.ne.s32.totalorder %s149, %s163
    %p165 = scmp.eq.s32.totalorder %s18, 0
    %p166 = por %p164, %p165
    %s167 = ssub.s32 %s19, %s31
    %s168 = ssub.s32 %s20, %s27
    %s169 = sor.u32 %s167, %s168
    %p170 = scmp.eq.s32.totalorder %s169, 0
    %s172 = sadd.s32 %s171, 1
    %s173 = scalar_select %p170, %s171, %s172
    %p176 = pneg %p170
    %p177 = scmp.eq.s32.totalorder %s12, 3
    %p178 = por %p176, %p177
    %p179 = scmp.ne.s32.totalorder %s171, %s174
    %p180 = scmp.eq.s32.totalorder %s12, 0
    %p181 = por %p179, %p180
    %p182 = scmp.ne.s32.totalorder %s171, %s174
    %p183 = scmp.eq.s32.totalorder %s17, 3
    %p184 = por %p182, %p183
    %p185 = scmp.ne.s32.totalorder %s174, %s175
    %p186 = scmp.eq.s32.totalorder %s17, 0
    %p187 = por %p185, %p186
    %p188 = scmp.ne.s32.totalorder %s174, %s175
    %p189 = scmp.eq.s32.totalorder %s18, 3
    %p190 = por %p188, %p189
    %p192 = scmp.ne.s32.totalorder %s175, %s191
    %p193 = scmp.eq.s32.totalorder %s18, 0
    %p194 = por %p192, %p193
    %p195 = scmp.le.s32.totalorder 1, %s12
    %p196 = scmp.lt.s32.totalorder %s12, 5
    %p197 = pnand %p195, %p196
    %p198 = pneg %p197
    // Predicated region
    $region9: #{_forward_impl.1} parent=5 // pred_check
      _
    $region10: #{_forward_impl.1} parent=5 // pred_check_branch
      %200 = sbr.rel (%p197) target = $region12
    $region11: #{_forward_impl.1} parent=5 // pred_region
      %s201 = ssub.s32 %s12, 1
      // Predicated region
      $region13: #{_forward_impl.1} parent=11 // pred_check
        %p202 = pneg %p75
      $region14: #{_forward_impl.1} parent=11 // pred_check_branch
        %204 = sbr.rel (%p202) target = $region16
      $region15: #{_forward_impl.1} parent=11 // pred_region
        _
      $region16: #{_forward_impl.1} parent=11 // pred_fallthru
        _
      // Predicated region
      $region17: #{_forward_impl.1} parent=11 // pred_check
        %p205 = pneg %p96
      $region18: #{_forward_impl.1} parent=11 // pred_check_branch
        %207 = sbr.rel (%p205) target = $region20
      $region19: #{_forward_impl.1} parent=11 // pred_region
        _
      $region20: #{_forward_impl.1} parent=11 // pred_fallthru
        _
      // Predicated region
      $region21: #{_forward_impl.1} parent=11 // pred_check
        %p208 = pneg %p117
      $region22: #{_forward_impl.1} parent=11 // pred_check_branch
        %210 = sbr.rel (%p208) target = $region24
      $region23: #{_forward_impl.1} parent=11 // pred_region
        _
      $region24: #{_forward_impl.1} parent=11 // pred_fallthru
        _
      // Predicated region
      $region25: #{_forward_impl.1} parent=11 // pred_check
        %p211 = pneg %p138
      $region26: #{_forward_impl.1} parent=11 // pred_check_branch
        %213 = sbr.rel (%p211) target = $region28
      $region27: #{_forward_impl.1} parent=11 // pred_region
        _
      $region28: #{_forward_impl.1} parent=11 // pred_fallthru
        _
      // Predicated region
      $region29: #{_forward_impl.1} parent=11 // pred_check
        %p214 = pneg %p159
      $region30: #{_forward_impl.1} parent=11 // pred_check_branch
        %216 = sbr.rel (%p214) target = $region32
      $region31: #{_forward_impl.1} parent=11 // pred_region
        _
      $region32: #{_forward_impl.1} parent=11 // pred_fallthru
        _
    $region12: #{_forward_impl.1} parent=5 // pred_fallthru
      _
    %p217 = scmp.lt.s32.totalorder %s12, 4
    // Predicated region
    $region33: #{_forward_impl.1} parent=5 // pred_check
      %p218 = pneg %p217
    $region34: #{_forward_impl.1} parent=5 // pred_check_branch
      %220 = sbr.rel (%p218) target = $region36
    $region35: #{_forward_impl.1} parent=5 // pred_region
      // Predicated region
      $region37: #{_forward_impl.1} parent=35 // pred_check
        %p221 = pneg %p48
      $region38: #{_forward_impl.1} parent=35 // pred_check_branch
        %223 = sbr.rel (%p221) target = $region40
      $region39: #{_forward_impl.1} parent=35 // pred_region
        %s224 = smul.u32 %s19, 2
        %s225 = sadd.s32 %s224, %s20
        %p226 = scmp.lt.s32.totalorder %s225, 3
        %s227 = scalar_select %p226, %s225, 3
        %s228 = smul.addr %s227, 30
        %s229 = smul.addr %s228, 8
        %s230 = scalar_lea.vmem %s0, %s229
        %s231 = smul.u32 %s19, 2
        %s232 = sadd.s32 %s231, %s20
      $region40: #{_forward_impl.1} parent=35 // pred_fallthru
        _
    $region36: #{_forward_impl.1} parent=5 // pred_fallthru
      _
    %p233 = scmp.le.s32.totalorder 1, %s12
    %p234 = scmp.lt.s32.totalorder %s12, 5
    %p235 = pnand %p233, %p234
    %p236 = pneg %p235
    // Predicated region
    $region41: #{_forward_impl.1} parent=5 // pred_check
      _
    $region42: #{_forward_impl.1} parent=5 // pred_check_branch
      %238 = sbr.rel (%p235) target = $region44
    $region43: #{_forward_impl.1} parent=5 // pred_region
      %s239 = ssub.s32 %s12, 1
      %s240 = smul.u32 %s21, 2
      %s241 = sadd.s32 %s240, %s22
      %p242 = scmp.lt.s32.totalorder %s241, 3
      %s243 = scalar_select %p242, %s241, 3
      %s244 = smul.addr %s243, 30
      %s245 = smul.addr %s244, 8
      %s246 = scalar_lea.vmem %s0, %s245
      %p247 = pneg %p54
      %p248 = pneg %p51
      %p249 = pneg %p75
      %p250 = pneg %p72
      %p251 = pneg %p96
      %p252 = pneg %p93
      %p253 = pneg %p117
      %p254 = pneg %p114
      %p255 = pneg %p138
      %p256 = pneg %p135
      %p257 = pneg %p159
      %p258 = pneg %p156
      %p259 = pneg %p187
      %p260 = pneg %p184
      %s261 = smul.u32 8, %s22
      %p262 = scmp.lt.s32.totalorder %s21, 1
      %s263 = scalar_select %p262, %s21, 1
      %p264 = scmp.lt.s32.totalorder %s261, 15
      %s265 = scalar_select %p264, %s261, 15
      %s266 = smul.addr %s265, 2
      %s267 = smul.addr %s263, 32
      %s268 = sadd.s32 %s266, %s267
      %s269 = smul.addr %s268, 8
      %s270 = scalar_lea.vmem %s6, %s269
      %s271 = smul.u32 %s21, 2
      %s272 = sadd.s32 %s271, %s22
      %p273 = scmp.lt.s32.totalorder %s272, 3
      %s274 = scalar_select %p273, %s272, 3
      %s275 = smul.addr %s274, 30
      %s276 = smul.addr %s275, 8
      %s277 = scalar_lea.vmem %s0, %s276
      %s278 = smul.u32 %s21, 2
      %s279 = sadd.s32 %s278, %s22
      %s280 = smul.u32 8, %s22
      %p281 = scmp.lt.s32.totalorder %s21, 1
      %s282 = scalar_select %p281, %s21, 1
      %p283 = scmp.lt.s32.totalorder %s280, 15
      %s284 = scalar_select %p283, %s280, 15
      %s285 = smul.addr %s284, 2
      %s286 = smul.addr %s282, 32
      %s287 = sadd.s32 %s285, %s286
      %s288 = smul.addr %s287, 8
      %s289 = scalar_lea.vmem %s6, %s288
      %s290 = smul.u32 8, %s22
      %v291 = vld [vmem:[%s277] sm:$0xff]
      %v292 = vld [vmem:[%s277 + $0x8] sm:$0xff]
      %v293 = vld [vmem:[%s277 + $0x10] sm:$0xff]
      %v294 = vld [vmem:[%s277 + $0x18] sm:$0xff]
      %v295 = vld [vmem:[%s277 + $0x20] sm:$0xff]
      %v296 = vld [vmem:[%s277 + $0x28] sm:$0xff]
      %v297 = vld [vmem:[%s277 + $0x30] sm:$0xff]
      %v298 = vld [vmem:[%s277 + $0x38] sm:$0xff]
      %v299 = vld [vmem:[%s277 + $0x40] sm:$0xff]
      %v300 = vld [vmem:[%s277 + $0x48] sm:$0xff]
      %v301 = vld [vmem:[%s277 + $0x50] sm:$0xff]
      %v302 = vld [vmem:[%s277 + $0x58] sm:$0xff]
      %v303 = vld [vmem:[%s277 + $0x60] sm:$0xff]
      %v304 = vld [vmem:[%s277 + $0x68] sm:$0xff]
      %v305 = vld [vmem:[%s277 + $0x70] sm:$0xff]
      %v306 = vld [vmem:[%s277 + $0x78] sm:$0xff]
      %v307 = vld [vmem:[%s277 + $0x80] sm:$0xff]
      %v308 = vld [vmem:[%s277 + $0x88] sm:$0xff]
      %v309 = vld [vmem:[%s277 + $0x90] sm:$0xff]
      %v310 = vld [vmem:[%s277 + $0x98] sm:$0xff]
      %v311 = vld [vmem:[%s277 + $0xa0] sm:$0xff]
      %v312 = vld [vmem:[%s277 + $0xa8] sm:$0xff]
      %v313 = vld [vmem:[%s277 + $0xb0] sm:$0xff]
      %v314 = vld [vmem:[%s277 + $0xb8] sm:$0xff]
      %v315 = vld [vmem:[%s277 + $0xc0] sm:$0xff]
      %v316 = vld [vmem:[%s277 + $0xc8] sm:$0xff]
      %v317 = vld [vmem:[%s277 + $0xd0] sm:$0xff]
      %v318 = vld [vmem:[%s277 + $0xd8] sm:$0xff]
      %v319 = vld [vmem:[%s277 + $0xe0] sm:$0xff]
      %v320 = vld [vmem:[%s277 + $0xe8] sm:$0xff]
      %v321 = vld [vmem:[%s1] sm:$0xff]
      %v322 = vld [vmem:[%s1 + $0x8] sm:$0xff]
      %v323 = vld [vmem:[%s1 + $0x10] sm:$0xff]
      %v324 = vld [vmem:[%s1 + $0x18] sm:$0xff]
      %v325 = vld [vmem:[%s1 + $0x20] sm:$0xff]
      %v326 = vld [vmem:[%s1 + $0x28] sm:$0xff]
      %v327 = vld [vmem:[%s1 + $0x30] sm:$0xff]
      %v328 = vld [vmem:[%s1 + $0x38] sm:$0xff]
      %v329 = vld [vmem:[%s1 + $0x40] sm:$0xff]
      %v330 = vld [vmem:[%s1 + $0x48] sm:$0xff]
      %v331 = vld [vmem:[%s1 + $0x50] sm:$0xff]
      %v332 = vld [vmem:[%s1 + $0x58] sm:$0xff]
      %v333 = vld [vmem:[%s1 + $0x60] sm:$0xff]
      %v334 = vld [vmem:[%s1 + $0x68] sm:$0xff]
      %v335 = vld [vmem:[%s1 + $0x70] sm:$0xff]
      %v336 = vld [vmem:[%s1 + $0x78] sm:$0xff]
      %337 = vmatpush.msra.mxu0 %v336
      %338 = vmatpush.msra.mxu0 %v335
      %339 = vmatpush.msra.mxu0 %v334
      %340 = vmatpush.msra.mxu0 %v333
      %341 = vmatpush.msra.mxu0 %v332
      %342 = vmatpush.msra.mxu0 %v331
      %343 = vmatpush.msra.mxu0 %v330
      %344 = vmatpush.msra.mxu0 %v329
      %345 = vmatpush.msra.mxu0 %v328
      %346 = vmatpush.msra.mxu0 %v327
      %347 = vmatpush.msra.mxu0 %v326
      %348 = vmatpush.msra.mxu0 %v325
      %349 = vmatpush.msra.mxu0 %v324
      %350 = vmatpush.msra.mxu0 %v323
      %351 = vmatpush.msra.mxu0 %v322
      %352 = vmatpush.msra.mxu0 %v321
      %353 = vmatmul.f32.gmra.mxu0 %v291
      %v354 = vpop.f32.mrf.mxu0
      %v355 = vadd.f32 0.0, %v354
      %356 = vmatmul.f32.gmra.mxu0 %v292
      %v357 = vpop.f32.mrf.mxu0
      %v358 = vadd.f32 0.0, %v357
      %359 = vmatmul.f32.gmra.mxu0 %v293
      %v360 = vpop.f32.mrf.mxu0
      %v361 = vadd.f32 0.0, %v360
      %362 = vmatmul.f32.gmra.mxu0 %v294
      %v363 = vpop.f32.mrf.mxu0
      %v364 = vadd.f32 0.0, %v363
      %365 = vmatmul.f32.gmra.mxu0 %v295
      %v366 = vpop.f32.mrf.mxu0
      %v367 = vadd.f32 0.0, %v366
      %368 = vmatmul.f32.gmra.mxu0 %v296
      %v369 = vpop.f32.mrf.mxu0
      %v370 = vadd.f32 0.0, %v369
      %371 = vmatmul.f32.gmra.mxu0 %v297
      %v372 = vpop.f32.mrf.mxu0
      %v373 = vadd.f32 0.0, %v372
      %374 = vmatmul.f32.gmra.mxu0 %v298
      %v375 = vpop.f32.mrf.mxu0
      %v376 = vadd.f32 0.0, %v375
      %377 = vmatmul.f32.gmra.mxu0 %v299
      %v378 = vpop.f32.mrf.mxu0
      %v379 = vadd.f32 0.0, %v378
      %380 = vmatmul.f32.gmra.mxu0 %v300
      %v381 = vpop.f32.mrf.mxu0
      %v382 = vadd.f32 0.0, %v381
      %383 = vmatmul.f32.gmra.mxu0 %v301
      %v384 = vpop.f32.mrf.mxu0
      %v385 = vadd.f32 0.0, %v384
      %386 = vmatmul.f32.gmra.mxu0 %v302
      %v387 = vpop.f32.mrf.mxu0
      %v388 = vadd.f32 0.0, %v387
      %389 = vmatmul.f32.gmra.mxu0 %v303
      %v390 = vpop.f32.mrf.mxu0
      %v391 = vadd.f32 0.0, %v390
      %392 = vmatmul.f32.gmra.mxu0 %v304
      %v393 = vpop.f32.mrf.mxu0
      %v394 = vadd.f32 0.0, %v393
      %395 = vmatmul.f32.gmra.mxu0 %v305
      %v396 = vpop.f32.mrf.mxu0
      %v397 = vadd.f32 0.0, %v396
      %398 = vmatmul.f32.gmra.mxu0 %v306
      %v399 = vpop.f32.mrf.mxu0
      %v400 = vadd.f32 0.0, %v399
      %401 = vmatmul.f32.gmra.mxu0 %v307
      %v402 = vpop.f32.mrf.mxu0
      %v403 = vadd.f32 0.0, %v402
      %404 = vmatmul.f32.gmra.mxu0 %v308
      %v405 = vpop.f32.mrf.mxu0
      %v406 = vadd.f32 0.0, %v405
      %407 = vmatmul.f32.gmra.mxu0 %v309
      %v408 = vpop.f32.mrf.mxu0
      %v409 = vadd.f32 0.0, %v408
      %410 = vmatmul.f32.gmra.mxu0 %v310
      %v411 = vpop.f32.mrf.mxu0
      %v412 = vadd.f32 0.0, %v411
      %413 = vmatmul.f32.gmra.mxu0 %v311
      %v414 = vpop.f32.mrf.mxu0
      %v415 = vadd.f32 0.0, %v414
      %416 = vmatmul.f32.gmra.mxu0 %v312
      %v417 = vpop.f32.mrf.mxu0
      %v418 = vadd.f32 0.0, %v417
      %419 = vmatmul.f32.gmra.mxu0 %v313
      %v420 = vpop.f32.mrf.mxu0
      %v421 = vadd.f32 0.0, %v420
      %422 = vmatmul.f32.gmra.mxu0 %v314
      %v423 = vpop.f32.mrf.mxu0
      %v424 = vadd.f32 0.0, %v423
      %425 = vmatmul.f32.gmra.mxu0 %v315
      %v426 = vpop.f32.mrf.mxu0
      %v427 = vadd.f32 0.0, %v426
      %428 = vmatmul.f32.gmra.mxu0 %v316
      %v429 = vpop.f32.mrf.mxu0
      %v430 = vadd.f32 0.0, %v429
      %431 = vmatmul.f32.gmra.mxu0 %v317
      %v432 = vpop.f32.mrf.mxu0
      %v433 = vadd.f32 0.0, %v432
      %434 = vmatmul.f32.gmra.mxu0 %v318
      %v435 = vpop.f32.mrf.mxu0
      %v436 = vadd.f32 0.0, %v435
      %437 = vmatmul.f32.gmra.mxu0 %v319
      %v438 = vpop.f32.mrf.mxu0
      %v439 = vadd.f32 0.0, %v438
      %440 = vmatmul.f32.gmra.mxu0 %v320
      %v441 = vpop.f32.mrf.mxu0
      %v442 = vadd.f32 0.0, %v441
      %443 = vdwg.mxu0
      %v444 = vmax.f32 %v355, 0.0
      %v445 = vmax.f32 %v358, 0.0
      %v446 = vmax.f32 %v361, 0.0
      %v447 = vmax.f32 %v364, 0.0
      %v448 = vmax.f32 %v367, 0.0
      %v449 = vmax.f32 %v370, 0.0
      %v450 = vmax.f32 %v373, 0.0
      %v451 = vmax.f32 %v376, 0.0
      %v452 = vmax.f32 %v379, 0.0
      %v453 = vmax.f32 %v382, 0.0
      %v454 = vmax.f32 %v385, 0.0
      %v455 = vmax.f32 %v388, 0.0
      %v456 = vmax.f32 %v391, 0.0
      %v457 = vmax.f32 %v394, 0.0
      %v458 = vmax.f32 %v397, 0.0
      %v459 = vmax.f32 %v400, 0.0
      %v460 = vmax.f32 %v403, 0.0
      %v461 = vmax.f32 %v406, 0.0
      %v462 = vmax.f32 %v409, 0.0
      %v463 = vmax.f32 %v412, 0.0
      %v464 = vmax.f32 %v415, 0.0
      %v465 = vmax.f32 %v418, 0.0
      %v466 = vmax.f32 %v421, 0.0
      %v467 = vmax.f32 %v424, 0.0
      %v468 = vmax.f32 %v427, 0.0
      %v469 = vmax.f32 %v430, 0.0
      %v470 = vmax.f32 %v433, 0.0
      %v471 = vmax.f32 %v436, 0.0
      %v472 = vmax.f32 %v439, 0.0
      %v473 = vmax.f32 %v442, 0.0
      %v474 = vmin.f32 %v444, 6.0
      %v475 = vmin.f32 %v445, 6.0
      %v476 = vmin.f32 %v446, 6.0
      %v477 = vmin.f32 %v447, 6.0
      %v478 = vmin.f32 %v448, 6.0
      %v479 = vmin.f32 %v449, 6.0
      %v480 = vmin.f32 %v450, 6.0
      %v481 = vmin.f32 %v451, 6.0
      %v482 = vmin.f32 %v452, 6.0
      %v483 = vmin.f32 %v453, 6.0
      %v484 = vmin.f32 %v454, 6.0
      %v485 = vmin.f32 %v455, 6.0
      %v486 = vmin.f32 %v456, 6.0
      %v487 = vmin.f32 %v457, 6.0
      %v488 = vmin.f32 %v458, 6.0
      %v489 = vmin.f32 %v459, 6.0
      %v490 = vmin.f32 %v460, 6.0
      %v491 = vmin.f32 %v461, 6.0
      %v492 = vmin.f32 %v462, 6.0
      %v493 = vmin.f32 %v463, 6.0
      %v494 = vmin.f32 %v464, 6.0
      %v495 = vmin.f32 %v465, 6.0
      %v496 = vmin.f32 %v466, 6.0
      %v497 = vmin.f32 %v467, 6.0
      %v498 = vmin.f32 %v468, 6.0
      %v499 = vmin.f32 %v469, 6.0
      %v500 = vmin.f32 %v470, 6.0
      %v501 = vmin.f32 %v471, 6.0
      %v502 = vmin.f32 %v472, 6.0
      %v503 = vmin.f32 %v473, 6.0
      %v504 = vld [vmem:[%s2] sm:$0x1]
      %v505 = vperm.slane %v504, 0
      %v506 = vmul.f32 %v474, %v505
      %v507 = vmul.f32 %v475, %v505
      %v508 = vmul.f32 %v477, %v505
      %v509 = vmul.f32 %v478, %v505
      %v510 = vmul.f32 %v480, %v505
      %v511 = vmul.f32 %v481, %v505
      %v512 = vmul.f32 %v483, %v505
      %v513 = vmul.f32 %v484, %v505
      %v514 = vmul.f32 %v486, %v505
      %v515 = vmul.f32 %v487, %v505
      %v516 = vmul.f32 %v489, %v505
      %v517 = vmul.f32 %v490, %v505
      %v518 = vmul.f32 %v492, %v505
      %v519 = vmul.f32 %v493, %v505
      %v520 = vmul.f32 %v495, %v505
      %v521 = vmul.f32 %v496, %v505
      %v522 = vadd.f32 %v506, 0.0
      %v523 = vadd.f32 %v507, 0.0
      %v524 = vadd.f32 %v508, 0.0
      %v525 = vadd.f32 %v509, 0.0
      %v526 = vadd.f32 %v510, 0.0
      %v527 = vadd.f32 %v511, 0.0
      %v528 = vadd.f32 %v512, 0.0
      %v529 = vadd.f32 %v513, 0.0
      %v530 = vadd.f32 %v514, 0.0
      %v531 = vadd.f32 %v515, 0.0
      %v532 = vadd.f32 %v516, 0.0
      %v533 = vadd.f32 %v517, 0.0
      %v534 = vadd.f32 %v518, 0.0
      %v535 = vadd.f32 %v519, 0.0
      %v536 = vadd.f32 %v520, 0.0
      %v537 = vadd.f32 %v521, 0.0
      %v538 = vld [vmem:[%s2 + $0x1] sm:$0x1]
      %v539 = vperm.slane %v538, 0
      %v540 = vmul.f32 %v474, %v539
      %v541 = vmul.f32 %v475, %v539
      %v542 = vmul.f32 %v476, %v539
      %v543 = vmul.f32 %v477, %v539
      %v544 = vmul.f32 %v478, %v539
      %v545 = vmul.f32 %v479, %v539
      %v546 = vmul.f32 %v480, %v539
      %v547 = vmul.f32 %v481, %v539
      %v548 = vmul.f32 %v482, %v539
      %v549 = vmul.f32 %v483, %v539
      %v550 = vmul.f32 %v484, %v539
      %v551 = vmul.f32 %v485, %v539
      %v552 = vmul.f32 %v486, %v539
      %v553 = vmul.f32 %v487, %v539
      %v554 = vmul.f32 %v488, %v539
      %v555 = vmul.f32 %v489, %v539
      %v556 = vmul.f32 %v490, %v539
      %v557 = vmul.f32 %v491, %v539
      %v558 = vmul.f32 %v492, %v539
      %v559 = vmul.f32 %v493, %v539
      %v560 = vmul.f32 %v494, %v539
      %v561 = vmul.f32 %v495, %v539
      %v562 = vmul.f32 %v496, %v539
      %v563 = vmul.f32 %v497, %v539
      %vm588 = vcmask 1046528
      %v589 = vrot.slane %v540, 1
      %v590 = vrot.slane %v541, 1
      %v591 = vsel %vm588, %v589, %v590
      %v592 = vrot.slane %v542, 1
      %v593 = vsel %vm588, %v590, %v592
      %v594 = vrot.slane %v543, 1
      %v595 = vrot.slane %v544, 1
      %v596 = vsel %vm588, %v594, %v595
      %v597 = vrot.slane %v545, 1
      %v598 = vsel %vm588, %v595, %v597
      %v599 = vrot.slane %v546, 1
      %v600 = vrot.slane %v547, 1
      %v601 = vsel %vm588, %v599, %v600
      %v602 = vrot.slane %v548, 1
      %v603 = vsel %vm588, %v600, %v602
      %v604 = vrot.slane %v549, 1
      %v605 = vrot.slane %v550, 1
      %v606 = vsel %vm588, %v604, %v605
      %v607 = vrot.slane %v551, 1
      %v608 = vsel %vm588, %v605, %v607
      %v609 = vrot.slane %v552, 1
      %v610 = vrot.slane %v553, 1
      %v611 = vsel %vm588, %v609, %v610
      %v612 = vrot.slane %v554, 1
      %v613 = vsel %vm588, %v610, %v612
      %v614 = vrot.slane %v555, 1
      %v615 = vrot.slane %v556, 1
      %v616 = vsel %vm588, %v614, %v615
      %v617 = vrot.slane %v557, 1
      %v618 = vsel %vm588, %v615, %v617
      %v619 = vrot.slane %v558, 1
      %v620 = vrot.slane %v559, 1
      %v621 = vsel %vm588, %v619, %v620
      %v622 = vrot.slane %v560, 1
      %v623 = vsel %vm588, %v620, %v622
      %v624 = vrot.slane %v561, 1
      %v625 = vrot.slane %v562, 1
      %v626 = vsel %vm588, %v624, %v625
      %v627 = vrot.slane %v563, 1
      %v628 = vsel %vm588, %v625, %v627
      %v645 = vadd.f32 %v522, %v591
      %v646 = vadd.f32 %v523, %v593
      %v647 = vadd.f32 %v524, %v596
      %v648 = vadd.f32 %v525, %v598
      %v649 = vadd.f32 %v526, %v601
      %v650 = vadd.f32 %v527, %v603
      %v651 = vadd.f32 %v528, %v606
      %v652 = vadd.f32 %v529, %v608
      %v653 = vadd.f32 %v530, %v611
      %v654 = vadd.f32 %v531, %v613
      %v655 = vadd.f32 %v532, %v616
      %v656 = vadd.f32 %v533, %v618
      %v657 = vadd.f32 %v534, %v621
      %v658 = vadd.f32 %v535, %v623
      %v659 = vadd.f32 %v536, %v626
      %v660 = vadd.f32 %v537, %v628
      %v661 = vld [vmem:[%s2 + $0x2] sm:$0x1]
      %v662 = vperm.slane %v661, 0
      %v663 = vmul.f32 %v474, %v662
      %v664 = vmul.f32 %v475, %v662
      %v665 = vmul.f32 %v476, %v662
      %v666 = vmul.f32 %v477, %v662
      %v667 = vmul.f32 %v478, %v662
      %v668 = vmul.f32 %v479, %v662
      %v669 = vmul.f32 %v480, %v662
      %v670 = vmul.f32 %v481, %v662
      %v671 = vmul.f32 %v482, %v662
      %v672 = vmul.f32 %v483, %v662
      %v673 = vmul.f32 %v484, %v662
      %v674 = vmul.f32 %v485, %v662
      %v675 = vmul.f32 %v486, %v662
      %v676 = vmul.f32 %v487, %v662
      %v677 = vmul.f32 %v488, %v662
      %v678 = vmul.f32 %v489, %v662
      %v679 = vmul.f32 %v490, %v662
      %v680 = vmul.f32 %v491, %v662
      %v681 = vmul.f32 %v492, %v662
      %v682 = vmul.f32 %v493, %v662
      %v683 = vmul.f32 %v494, %v662
      %v684 = vmul.f32 %v495, %v662
      %v685 = vmul.f32 %v496, %v662
      %v686 = vmul.f32 %v497, %v662
      %vm711 = vcmask 1045504
      %v712 = vrot.slane %v663, 2
      %v713 = vrot.slane %v664, 2
      %v714 = vsel %vm711, %v712, %v713
      %v715 = vrot.slane %v665, 2
      %v716 = vsel %vm711, %v713, %v715
      %v717 = vrot.slane %v666, 2
      %v718 = vrot.slane %v667, 2
      %v719 = vsel %vm711, %v717, %v718
      %v720 = vrot.slane %v668, 2
      %v721 = vsel %vm711, %v718, %v720
      %v722 = vrot.slane %v669, 2
      %v723 = vrot.slane %v670, 2
      %v724 = vsel %vm711, %v722, %v723
      %v725 = vrot.slane %v671, 2
      %v726 = vsel %vm711, %v723, %v725
      %v727 = vrot.slane %v672, 2
      %v728 = vrot.slane %v673, 2
      %v729 = vsel %vm711, %v727, %v728
      %v730 = vrot.slane %v674, 2
      %v731 = vsel %vm711, %v728, %v730
      %v732 = vrot.slane %v675, 2
      %v733 = vrot.slane %v676, 2
      %v734 = vsel %vm711, %v732, %v733
      %v735 = vrot.slane %v677, 2
      %v736 = vsel %vm711, %v733, %v735
      %v737 = vrot.slane %v678, 2
      %v738 = vrot.slane %v679, 2
      %v739 = vsel %vm711, %v737, %v738
      %v740 = vrot.slane %v680, 2
      %v741 = vsel %vm711, %v738, %v740
      %v742 = vrot.slane %v681, 2
      %v743 = vrot.slane %v682, 2
      %v744 = vsel %vm711, %v742, %v743
      %v745 = vrot.slane %v683, 2
      %v746 = vsel %vm711, %v743, %v745
      %v747 = vrot.slane %v684, 2
      %v748 = vrot.slane %v685, 2
      %v749 = vsel %vm711, %v747, %v748
      %v750 = vrot.slane %v686, 2
      %v751 = vsel %vm711, %v748, %v750
      %v768 = vadd.f32 %v645, %v714
      %v769 = vadd.f32 %v646, %v716
      %v770 = vadd.f32 %v647, %v719
      %v771 = vadd.f32 %v648, %v721
      %v772 = vadd.f32 %v649, %v724
      %v773 = vadd.f32 %v650, %v726
      %v774 = vadd.f32 %v651, %v729
      %v775 = vadd.f32 %v652, %v731
      %v776 = vadd.f32 %v653, %v734
      %v777 = vadd.f32 %v654, %v736
      %v778 = vadd.f32 %v655, %v739
      %v779 = vadd.f32 %v656, %v741
      %v780 = vadd.f32 %v657, %v744
      %v781 = vadd.f32 %v658, %v746
      %v782 = vadd.f32 %v659, %v749
      %v783 = vadd.f32 %v660, %v751
      %s784 = scalar_lea.vmem %s2, 4
      %v785 = vld [vmem:[%s784] sm:$0x1]
      %v786 = vperm.slane %v785, 0
      %v787 = vmul.f32 %v477, %v786
      %v788 = vmul.f32 %v478, %v786
      %v789 = vmul.f32 %v480, %v786
      %v790 = vmul.f32 %v481, %v786
      %v791 = vmul.f32 %v483, %v786
      %v792 = vmul.f32 %v484, %v786
      %v793 = vmul.f32 %v486, %v786
      %v794 = vmul.f32 %v487, %v786
      %v795 = vmul.f32 %v489, %v786
      %v796 = vmul.f32 %v490, %v786
      %v797 = vmul.f32 %v492, %v786
      %v798 = vmul.f32 %v493, %v786
      %v799 = vmul.f32 %v495, %v786
      %v800 = vmul.f32 %v496, %v786
      %v801 = vmul.f32 %v498, %v786
      %v802 = vmul.f32 %v499, %v786
      %v803 = vadd.f32 %v768, %v787
      %v804 = vadd.f32 %v769, %v788
      %v805 = vadd.f32 %v770, %v789
      %v806 = vadd.f32 %v771, %v790
      %v807 = vadd.f32 %v772, %v791
      %v808 = vadd.f32 %v773, %v792
      %v809 = vadd.f32 %v774, %v793
      %v810 = vadd.f32 %v775, %v794
      %v811 = vadd.f32 %v776, %v795
      %v812 = vadd.f32 %v777, %v796
      %v813 = vadd.f32 %v778, %v797
      %v814 = vadd.f32 %v779, %v798
      %v815 = vadd.f32 %v780, %v799
      %v816 = vadd.f32 %v781, %v800
      %v817 = vadd.f32 %v782, %v801
      %v818 = vadd.f32 %v783, %v802
      %v819 = vld [vmem:[%s784 + $0x1] sm:$0x1]
      %v820 = vperm.slane %v819, 0
      %v821 = vmul.f32 %v477, %v820
      %v822 = vmul.f32 %v478, %v820
      %v823 = vmul.f32 %v479, %v820
      %v824 = vmul.f32 %v480, %v820
      %v825 = vmul.f32 %v481, %v820
      %v826 = vmul.f32 %v482, %v820
      %v827 = vmul.f32 %v483, %v820
      %v828 = vmul.f32 %v484, %v820
      %v829 = vmul.f32 %v485, %v820
      %v830 = vmul.f32 %v486, %v820
      %v831 = vmul.f32 %v487, %v820
      %v832 = vmul.f32 %v488, %v820
      %v833 = vmul.f32 %v489, %v820
      %v834 = vmul.f32 %v490, %v820
      %v835 = vmul.f32 %v491, %v820
      %v836 = vmul.f32 %v492, %v820
      %v837 = vmul.f32 %v493, %v820
      %v838 = vmul.f32 %v494, %v820
      %v839 = vmul.f32 %v495, %v820
      %v840 = vmul.f32 %v496, %v820
      %v841 = vmul.f32 %v497, %v820
      %v842 = vmul.f32 %v498, %v820
      %v843 = vmul.f32 %v499, %v820
      %v844 = vmul.f32 %v500, %v820
      %v869 = vrot.slane %v821, 1
      %v870 = vrot.slane %v822, 1
      %v871 = vsel %vm588, %v869, %v870
      %v872 = vrot.slane %v823, 1
      %v873 = vsel %vm588, %v870, %v872
      %v874 = vrot.slane %v824, 1
      %v875 = vrot.slane %v825, 1
      %v876 = vsel %vm588, %v874, %v875
      %v877 = vrot.slane %v826, 1
      %v878 = vsel %vm588, %v875, %v877
      %v879 = vrot.slane %v827, 1
      %v880 = vrot.slane %v828, 1
      %v881 = vsel %vm588, %v879, %v880
      %v882 = vrot.slane %v829, 1
      %v883 = vsel %vm588, %v880, %v882
      %v884 = vrot.slane %v830, 1
      %v885 = vrot.slane %v831, 1
      %v886 = vsel %vm588, %v884, %v885
      %v887 = vrot.slane %v832, 1
      %v888 = vsel %vm588, %v885, %v887
      %v889 = vrot.slane %v833, 1
      %v890 = vrot.slane %v834, 1
      %v891 = vsel %vm588, %v889, %v890
      %v892 = vrot.slane %v835, 1
      %v893 = vsel %vm588, %v890, %v892
      %v894 = vrot.slane %v836, 1
      %v895 = vrot.slane %v837, 1
      %v896 = vsel %vm588, %v894, %v895
      %v897 = vrot.slane %v838, 1
      %v898 = vsel %vm588, %v895, %v897
      %v899 = vrot.slane %v839, 1
      %v900 = vrot.slane %v840, 1
      %v901 = vsel %vm588, %v899, %v900
      %v902 = vrot.slane %v841, 1
      %v903 = vsel %vm588, %v900, %v902
      %v904 = vrot.slane %v842, 1
      %v905 = vrot.slane %v843, 1
      %v906 = vsel %vm588, %v904, %v905
      %v907 = vrot.slane %v844, 1
      %v908 = vsel %vm588, %v905, %v907
      %v925 = vadd.f32 %v803, %v871
      %v926 = vadd.f32 %v804, %v873
      %v927 = vadd.f32 %v805, %v876
      %v928 = vadd.f32 %v806, %v878
      %v929 = vadd.f32 %v807, %v881
      %v930 = vadd.f32 %v808, %v883
      %v931 = vadd.f32 %v809, %v886
      %v932 = vadd.f32 %v810, %v888
      %v933 = vadd.f32 %v811, %v891
      %v934 = vadd.f32 %v812, %v893
      %v935 = vadd.f32 %v813, %v896
      %v936 = vadd.f32 %v814, %v898
      %v937 = vadd.f32 %v815, %v901
      %v938 = vadd.f32 %v816, %v903
      %v939 = vadd.f32 %v817, %v906
      %v940 = vadd.f32 %v818, %v908
      %v941 = vld [vmem:[%s784 + $0x2] sm:$0x1]
      %v942 = vperm.slane %v941, 0
      %v943 = vmul.f32 %v477, %v942
      %v944 = vmul.f32 %v478, %v942
      %v945 = vmul.f32 %v479, %v942
      %v946 = vmul.f32 %v480, %v942
      %v947 = vmul.f32 %v481, %v942
      %v948 = vmul.f32 %v482, %v942
      %v949 = vmul.f32 %v483, %v942
      %v950 = vmul.f32 %v484, %v942
      %v951 = vmul.f32 %v485, %v942
      %v952 = vmul.f32 %v486, %v942
      %v953 = vmul.f32 %v487, %v942
      %v954 = vmul.f32 %v488, %v942
      %v955 = vmul.f32 %v489, %v942
      %v956 = vmul.f32 %v490, %v942
      %v957 = vmul.f32 %v491, %v942
      %v958 = vmul.f32 %v492, %v942
      %v959 = vmul.f32 %v493, %v942
      %v960 = vmul.f32 %v494, %v942
      %v961 = vmul.f32 %v495, %v942
      %v962 = vmul.f32 %v496, %v942
      %v963 = vmul.f32 %v497, %v942
      %v964 = vmul.f32 %v498, %v942
      %v965 = vmul.f32 %v499, %v942
      %v966 = vmul.f32 %v500, %v942
      %v991 = vrot.slane %v943, 2
      %v992 = vrot.slane %v944, 2
      %v993 = vsel %vm711, %v991, %v992
      %v994 = vrot.slane %v945, 2
      %v995 = vsel %vm711, %v992, %v994
      %v996 = vrot.slane %v946, 2
      %v997 = vrot.slane %v947, 2
      %v998 = vsel %vm711, %v996, %v997
      %v999 = vrot.slane %v948, 2
      %v1000 = vsel %vm711, %v997, %v999
      %v1001 = vrot.slane %v949, 2
      %v1002 = vrot.slane %v950, 2
      %v1003 = vsel %vm711, %v1001, %v1002
      %v1004 = vrot.slane %v951, 2
      %v1005 = vsel %vm711, %v1002, %v1004
      %v1006 = vrot.slane %v952, 2
      %v1007 = vrot.slane %v953, 2
      %v1008 = vsel %vm711, %v1006, %v1007
      %v1009 = vrot.slane %v954, 2
      %v1010 = vsel %vm711, %v1007, %v1009
      %v1011 = vrot.slane %v955, 2
      %v1012 = vrot.slane %v956, 2
      %v1013 = vsel %vm711, %v1011, %v1012
      %v1014 = vrot.slane %v957, 2
      %v1015 = vsel %vm711, %v1012, %v1014
      %v1016 = vrot.slane %v958, 2
      %v1017 = vrot.slane %v959, 2
      %v1018 = vsel %vm711, %v1016, %v1017
      %v1019 = vrot.slane %v960, 2
      %v1020 = vsel %vm711, %v1017, %v1019
      %v1021 = vrot.slane %v961, 2
      %v1022 = vrot.slane %v962, 2
      %v1023 = vsel %vm711, %v1021, %v1022
      %v1024 = vrot.slane %v963, 2
      %v1025 = vsel %vm711, %v1022, %v1024
      %v1026 = vrot.slane %v964, 2
      %v1027 = vrot.slane %v965, 2
      %v1028 = vsel %vm711, %v1026, %v1027
      %v1029 = vrot.slane %v966, 2
      %v1030 = vsel %vm711, %v1027, %v1029
      %v1047 = vadd.f32 %v925, %v993
      %v1048 = vadd.f32 %v926, %v995
      %v1049 = vadd.f32 %v927, %v998
      %v1050 = vadd.f32 %v928, %v1000
      %v1051 = vadd.f32 %v929, %v1003
      %v1052 = vadd.f32 %v930, %v1005
      %v1053 = vadd.f32 %v931, %v1008
      %v1054 = vadd.f32 %v932, %v1010
      %v1055 = vadd.f32 %v933, %v1013
      %v1056 = vadd.f32 %v934, %v1015
      %v1057 = vadd.f32 %v935, %v1018
      %v1058 = vadd.f32 %v936, %v1020
      %v1059 = vadd.f32 %v937, %v1023
      %v1060 = vadd.f32 %v938, %v1025
      %v1061 = vadd.f32 %v939, %v1028
      %v1062 = vadd.f32 %v940, %v1030
      %s1063 = scalar_lea.vmem %s2, 8
      %v1064 = vld [vmem:[%s1063] sm:$0x1]
      %v1065 = vperm.slane %v1064, 0
      %v1066 = vmul.f32 %v480, %v1065
      %v1067 = vmul.f32 %v481, %v1065
      %v1068 = vmul.f32 %v483, %v1065
      %v1069 = vmul.f32 %v484, %v1065
      %v1070 = vmul.f32 %v486, %v1065
      %v1071 = vmul.f32 %v487, %v1065
      %v1072 = vmul.f32 %v489, %v1065
      %v1073 = vmul.f32 %v490, %v1065
      %v1074 = vmul.f32 %v492, %v1065
      %v1075 = vmul.f32 %v493, %v1065
      %v1076 = vmul.f32 %v495, %v1065
      %v1077 = vmul.f32 %v496, %v1065
      %v1078 = vmul.f32 %v498, %v1065
      %v1079 = vmul.f32 %v499, %v1065
      %v1080 = vmul.f32 %v501, %v1065
      %v1081 = vmul.f32 %v502, %v1065
      %v1082 = vadd.f32 %v1047, %v1066
      %v1083 = vadd.f32 %v1048, %v1067
      %v1084 = vadd.f32 %v1049, %v1068
      %v1085 = vadd.f32 %v1050, %v1069
      %v1086 = vadd.f32 %v1051, %v1070
      %v1087 = vadd.f32 %v1052, %v1071
      %v1088 = vadd.f32 %v1053, %v1072
      %v1089 = vadd.f32 %v1054, %v1073
      %v1090 = vadd.f32 %v1055, %v1074
      %v1091 = vadd.f32 %v1056, %v1075
      %v1092 = vadd.f32 %v1057, %v1076
      %v1093 = vadd.f32 %v1058, %v1077
      %v1094 = vadd.f32 %v1059, %v1078
      %v1095 = vadd.f32 %v1060, %v1079
      %v1096 = vadd.f32 %v1061, %v1080
      %v1097 = vadd.f32 %v1062, %v1081
      %v1098 = vld [vmem:[%s1063 + $0x1] sm:$0x1]
      %v1099 = vperm.slane %v1098, 0
      %v1100 = vmul.f32 %v480, %v1099
      %v1101 = vmul.f32 %v481, %v1099
      %v1102 = vmul.f32 %v482, %v1099
      %v1103 = vmul.f32 %v483, %v1099
      %v1104 = vmul.f32 %v484, %v1099
      %v1105 = vmul.f32 %v485, %v1099
      %v1106 = vmul.f32 %v486, %v1099
      %v1107 = vmul.f32 %v487, %v1099
      %v1108 = vmul.f32 %v488, %v1099
      %v1109 = vmul.f32 %v489, %v1099
      %v1110 = vmul.f32 %v490, %v1099
      %v1111 = vmul.f32 %v491, %v1099
      %v1112 = vmul.f32 %v492, %v1099
      %v1113 = vmul.f32 %v493, %v1099
      %v1114 = vmul.f32 %v494, %v1099
      %v1115 = vmul.f32 %v495, %v1099
      %v1116 = vmul.f32 %v496, %v1099
      %v1117 = vmul.f32 %v497, %v1099
      %v1118 = vmul.f32 %v498, %v1099
      %v1119 = vmul.f32 %v499, %v1099
      %v1120 = vmul.f32 %v500, %v1099
      %v1121 = vmul.f32 %v501, %v1099
      %v1122 = vmul.f32 %v502, %v1099
      %v1123 = vmul.f32 %v503, %v1099
      %v1148 = vrot.slane %v1100, 1
      %v1149 = vrot.slane %v1101, 1
      %v1150 = vsel %vm588, %v1148, %v1149
      %v1151 = vrot.slane %v1102, 1
      %v1152 = vsel %vm588, %v1149, %v1151
      %v1153 = vrot.slane %v1103, 1
      %v1154 = vrot.slane %v1104, 1
      %v1155 = vsel %vm588, %v1153, %v1154
      %v1156 = vrot.slane %v1105, 1
      %v1157 = vsel %vm588, %v1154, %v1156
      %v1158 = vrot.slane %v1106, 1
      %v1159 = vrot.slane %v1107, 1
      %v1160 = vsel %vm588, %v1158, %v1159
      %v1161 = vrot.slane %v1108, 1
      %v1162 = vsel %vm588, %v1159, %v1161
      %v1163 = vrot.slane %v1109, 1
      %v1164 = vrot.slane %v1110, 1
      %v1165 = vsel %vm588, %v1163, %v1164
      %v1166 = vrot.slane %v1111, 1
      %v1167 = vsel %vm588, %v1164, %v1166
      %v1168 = vrot.slane %v1112, 1
      %v1169 = vrot.slane %v1113, 1
      %v1170 = vsel %vm588, %v1168, %v1169
      %v1171 = vrot.slane %v1114, 1
      %v1172 = vsel %vm588, %v1169, %v1171
      %v1173 = vrot.slane %v1115, 1
      %v1174 = vrot.slane %v1116, 1
      %v1175 = vsel %vm588, %v1173, %v1174
      %v1176 = vrot.slane %v1117, 1
      %v1177 = vsel %vm588, %v1174, %v1176
      %v1178 = vrot.slane %v1118, 1
      %v1179 = vrot.slane %v1119, 1
      %v1180 = vsel %vm588, %v1178, %v1179
      %v1181 = vrot.slane %v1120, 1
      %v1182 = vsel %vm588, %v1179, %v1181
      %v1183 = vrot.slane %v1121, 1
      %v1184 = vrot.slane %v1122, 1
      %v1185 = vsel %vm588, %v1183, %v1184
      %v1186 = vrot.slane %v1123, 1
      %v1187 = vsel %vm588, %v1184, %v1186
      %v1204 = vadd.f32 %v1082, %v1150
      %v1205 = vadd.f32 %v1083, %v1152
      %v1206 = vadd.f32 %v1084, %v1155
      %v1207 = vadd.f32 %v1085, %v1157
      %v1208 = vadd.f32 %v1086, %v1160
      %v1209 = vadd.f32 %v1087, %v1162
      %v1210 = vadd.f32 %v1088, %v1165
      %v1211 = vadd.f32 %v1089, %v1167
      %v1212 = vadd.f32 %v1090, %v1170
      %v1213 = vadd.f32 %v1091, %v1172
      %v1214 = vadd.f32 %v1092, %v1175
      %v1215 = vadd.f32 %v1093, %v1177
      %v1216 = vadd.f32 %v1094, %v1180
      %v1217 = vadd.f32 %v1095, %v1182
      %v1218 = vadd.f32 %v1096, %v1185
      %v1219 = vadd.f32 %v1097, %v1187
      %v1220 = vld [vmem:[%s1063 + $0x2] sm:$0x1]
      %v1221 = vperm.slane %v1220, 0
      %v1222 = vmul.f32 %v480, %v1221
      %v1223 = vmul.f32 %v481, %v1221
      %v1224 = vmul.f32 %v482, %v1221
      %v1225 = vmul.f32 %v483, %v1221
      %v1226 = vmul.f32 %v484, %v1221
      %v1227 = vmul.f32 %v485, %v1221
      %v1228 = vmul.f32 %v486, %v1221
      %v1229 = vmul.f32 %v487, %v1221
      %v1230 = vmul.f32 %v488, %v1221
      %v1231 = vmul.f32 %v489, %v1221
      %v1232 = vmul.f32 %v490, %v1221
      %v1233 = vmul.f32 %v491, %v1221
      %v1234 = vmul.f32 %v492, %v1221
      %v1235 = vmul.f32 %v493, %v1221
      %v1236 = vmul.f32 %v494, %v1221
      %v1237 = vmul.f32 %v495, %v1221
      %v1238 = vmul.f32 %v496, %v1221
      %v1239 = vmul.f32 %v497, %v1221
      %v1240 = vmul.f32 %v498, %v1221
      %v1241 = vmul.f32 %v499, %v1221
      %v1242 = vmul.f32 %v500, %v1221
      %v1243 = vmul.f32 %v501, %v1221
      %v1244 = vmul.f32 %v502, %v1221
      %v1245 = vmul.f32 %v503, %v1221
      %v1270 = vrot.slane %v1222, 2
      %v1271 = vrot.slane %v1223, 2
      %v1272 = vsel %vm711, %v1270, %v1271
      %v1273 = vrot.slane %v1224, 2
      %v1274 = vsel %vm711, %v1271, %v1273
      %v1275 = vrot.slane %v1225, 2
      %v1276 = vrot.slane %v1226, 2
      %v1277 = vsel %vm711, %v1275, %v1276
      %v1278 = vrot.slane %v1227, 2
      %v1279 = vsel %vm711, %v1276, %v1278
      %v1280 = vrot.slane %v1228, 2
      %v1281 = vrot.slane %v1229, 2
      %v1282 = vsel %vm711, %v1280, %v1281
      %v1283 = vrot.slane %v1230, 2
      %v1284 = vsel %vm711, %v1281, %v1283
      %v1285 = vrot.slane %v1231, 2
      %v1286 = vrot.slane %v1232, 2
      %v1287 = vsel %vm711, %v1285, %v1286
      %v1288 = vrot.slane %v1233, 2
      %v1289 = vsel %vm711, %v1286, %v1288
      %v1290 = vrot.slane %v1234, 2
      %v1291 = vrot.slane %v1235, 2
      %v1292 = vsel %vm711, %v1290, %v1291
      %v1293 = vrot.slane %v1236, 2
      %v1294 = vsel %vm711, %v1291, %v1293
      %v1295 = vrot.slane %v1237, 2
      %v1296 = vrot.slane %v1238, 2
      %v1297 = vsel %vm711, %v1295, %v1296
      %v1298 = vrot.slane %v1239, 2
      %v1299 = vsel %vm711, %v1296, %v1298
      %v1300 = vrot.slane %v1240, 2
      %v1301 = vrot.slane %v1241, 2
      %v1302 = vsel %vm711, %v1300, %v1301
      %v1303 = vrot.slane %v1242, 2
      %v1304 = vsel %vm711, %v1301, %v1303
      %v1305 = vrot.slane %v1243, 2
      %v1306 = vrot.slane %v1244, 2
      %v1307 = vsel %vm711, %v1305, %v1306
      %v1308 = vrot.slane %v1245, 2
      %v1309 = vsel %vm711, %v1306, %v1308
      %v1326 = vadd.f32 %v1204, %v1272
      %v1327 = vadd.f32 %v1205, %v1274
      %v1328 = vadd.f32 %v1206, %v1277
      %v1329 = vadd.f32 %v1207, %v1279
      %v1330 = vadd.f32 %v1208, %v1282
      %v1331 = vadd.f32 %v1209, %v1284
      %v1332 = vadd.f32 %v1210, %v1287
      %v1333 = vadd.f32 %v1211, %v1289
      %v1334 = vadd.f32 %v1212, %v1292
      %v1335 = vadd.f32 %v1213, %v1294
      %v1336 = vadd.f32 %v1214, %v1297
      %v1337 = vadd.f32 %v1215, %v1299
      %v1338 = vadd.f32 %v1216, %v1302
      %v1339 = vadd.f32 %v1217, %v1304
      %v1340 = vadd.f32 %v1218, %v1307
      %v1341 = vadd.f32 %v1219, %v1309
      %v1342 = vld [vmem:[%s3] sm:$0x1]
      %v1344 = vperm.slane %v1342, 0
      %v1346 = vadd.f32 %v1326, %v1344
      %v1347 = vadd.f32 %v1327, %v1344
      %v1348 = vadd.f32 %v1328, %v1344
      %v1349 = vadd.f32 %v1329, %v1344
      %v1350 = vadd.f32 %v1330, %v1344
      %v1351 = vadd.f32 %v1331, %v1344
      %v1352 = vadd.f32 %v1332, %v1344
      %v1353 = vadd.f32 %v1333, %v1344
      %v1354 = vadd.f32 %v1334, %v1344
      %v1355 = vadd.f32 %v1335, %v1344
      %v1356 = vadd.f32 %v1336, %v1344
      %v1357 = vadd.f32 %v1337, %v1344
      %v1358 = vadd.f32 %v1338, %v1344
      %v1359 = vadd.f32 %v1339, %v1344
      %v1360 = vadd.f32 %v1340, %v1344
      %v1361 = vadd.f32 %v1341, %v1344
      %v1362 = vmax.f32 %v1346, 0.0
      %v1363 = vmax.f32 %v1347, 0.0
      %v1364 = vmax.f32 %v1348, 0.0
      %v1365 = vmax.f32 %v1349, 0.0
      %v1366 = vmax.f32 %v1350, 0.0
      %v1367 = vmax.f32 %v1351, 0.0
      %v1368 = vmax.f32 %v1352, 0.0
      %v1369 = vmax.f32 %v1353, 0.0
      %v1370 = vmax.f32 %v1354, 0.0
      %v1371 = vmax.f32 %v1355, 0.0
      %v1372 = vmax.f32 %v1356, 0.0
      %v1373 = vmax.f32 %v1357, 0.0
      %v1374 = vmax.f32 %v1358, 0.0
      %v1375 = vmax.f32 %v1359, 0.0
      %v1376 = vmax.f32 %v1360, 0.0
      %v1377 = vmax.f32 %v1361, 0.0
      %v1378 = vmin.f32 %v1362, 6.0
      %v1379 = vmin.f32 %v1363, 6.0
      %v1380 = vmin.f32 %v1364, 6.0
      %v1381 = vmin.f32 %v1365, 6.0
      %v1382 = vmin.f32 %v1366, 6.0
      %v1383 = vmin.f32 %v1367, 6.0
      %v1384 = vmin.f32 %v1368, 6.0
      %v1385 = vmin.f32 %v1369, 6.0
      %v1386 = vmin.f32 %v1370, 6.0
      %v1387 = vmin.f32 %v1371, 6.0
      %v1388 = vmin.f32 %v1372, 6.0
      %v1389 = vmin.f32 %v1373, 6.0
      %v1390 = vmin.f32 %v1374, 6.0
      %v1391 = vmin.f32 %v1375, 6.0
      %v1392 = vmin.f32 %v1376, 6.0
      %v1393 = vmin.f32 %v1377, 6.0
      %v1394 = vld [vmem:[%s4] sm:$0xff]
      %v1395 = vld [vmem:[%s4 + $0x8] sm:$0xff]
      %v1396 = vld [vmem:[%s4 + $0x10] sm:$0xff]
      %v1397 = vld [vmem:[%s4 + $0x18] sm:$0xff]
      %v1398 = vld [vmem:[%s4 + $0x20] sm:$0xff]
      %v1399 = vld [vmem:[%s4 + $0x28] sm:$0xff]
      %v1400 = vld [vmem:[%s4 + $0x30] sm:$0xff]
      %v1401 = vld [vmem:[%s4 + $0x38] sm:$0xff]
      %v1402 = vld [vmem:[%s4 + $0x40] sm:$0xff]
      %v1403 = vld [vmem:[%s4 + $0x48] sm:$0xff]
      %v1404 = vld [vmem:[%s4 + $0x50] sm:$0xff]
      %v1405 = vld [vmem:[%s4 + $0x58] sm:$0xff]
      %v1406 = vld [vmem:[%s4 + $0x60] sm:$0xff]
      %v1407 = vld [vmem:[%s4 + $0x68] sm:$0xff]
      %v1408 = vld [vmem:[%s4 + $0x70] sm:$0xff]
      %v1409 = vld [vmem:[%s4 + $0x78] sm:$0xff]
      %v1410 = vld [vmem:[%s5] sm:$0x1]
      %v1412 = vperm.slane %v1410, 0
      %1414 = vmatpush.msra.mxu0 %v1409
      %1415 = vmatpush.msra.mxu0 %v1408
      %1416 = vmatpush.msra.mxu0 %v1407
      %1417 = vmatpush.msra.mxu0 %v1406
      %1418 = vmatpush.msra.mxu0 %v1405
      %1419 = vmatpush.msra.mxu0 %v1404
      %1420 = vmatpush.msra.mxu0 %v1403
      %1421 = vmatpush.msra.mxu0 %v1402
      %1422 = vmatpush.msra.mxu0 %v1401
      %1423 = vmatpush.msra.mxu0 %v1400
      %1424 = vmatpush.msra.mxu0 %v1399
      %1425 = vmatpush.msra.mxu0 %v1398
      %1426 = vmatpush.msra.mxu0 %v1397
      %1427 = vmatpush.msra.mxu0 %v1396
      %1428 = vmatpush.msra.mxu0 %v1395
      %1429 = vmatpush.msra.mxu0 %v1394
      %1430 = vmatmul.f32.gmra.mxu0 %v1378
      %v1431 = vpop.f32.mrf.mxu0
      %v1432 = vadd.f32 %v1412, %v1431
      %1433 = vmatmul.f32.gmra.mxu0 %v1379
      %v1434 = vpop.f32.mrf.mxu0
      %v1435 = vadd.f32 %v1412, %v1434
      %1436 = vmatmul.f32.gmra.mxu0 %v1380
      %v1437 = vpop.f32.mrf.mxu0
      %v1438 = vadd.f32 %v1412, %v1437
      %1439 = vmatmul.f32.gmra.mxu0 %v1381
      %v1440 = vpop.f32.mrf.mxu0
      %v1441 = vadd.f32 %v1412, %v1440
      %1442 = vmatmul.f32.gmra.mxu0 %v1382
      %v1443 = vpop.f32.mrf.mxu0
      %v1444 = vadd.f32 %v1412, %v1443
      %1445 = vmatmul.f32.gmra.mxu0 %v1383
      %v1446 = vpop.f32.mrf.mxu0
      %v1447 = vadd.f32 %v1412, %v1446
      %1448 = vmatmul.f32.gmra.mxu0 %v1384
      %v1449 = vpop.f32.mrf.mxu0
      %v1450 = vadd.f32 %v1412, %v1449
      %1451 = vmatmul.f32.gmra.mxu0 %v1385
      %v1452 = vpop.f32.mrf.mxu0
      %v1453 = vadd.f32 %v1412, %v1452
      %1454 = vmatmul.f32.gmra.mxu0 %v1386
      %v1455 = vpop.f32.mrf.mxu0
      %v1456 = vadd.f32 %v1412, %v1455
      %1457 = vmatmul.f32.gmra.mxu0 %v1387
      %v1458 = vpop.f32.mrf.mxu0
      %v1459 = vadd.f32 %v1412, %v1458
      %1460 = vmatmul.f32.gmra.mxu0 %v1388
      %v1461 = vpop.f32.mrf.mxu0
      %v1462 = vadd.f32 %v1412, %v1461
      %1463 = vmatmul.f32.gmra.mxu0 %v1389
      %v1464 = vpop.f32.mrf.mxu0
      %v1465 = vadd.f32 %v1412, %v1464
      %1466 = vmatmul.f32.gmra.mxu0 %v1390
      %v1467 = vpop.f32.mrf.mxu0
      %v1468 = vadd.f32 %v1412, %v1467
      %1469 = vmatmul.f32.gmra.mxu0 %v1391
      %v1470 = vpop.f32.mrf.mxu0
      %v1471 = vadd.f32 %v1412, %v1470
      %1472 = vmatmul.f32.gmra.mxu0 %v1392
      %v1473 = vpop.f32.mrf.mxu0
      %v1474 = vadd.f32 %v1412, %v1473
      %1475 = vmatmul.f32.gmra.mxu0 %v1393
      %v1476 = vpop.f32.mrf.mxu0
      %v1477 = vadd.f32 %v1412, %v1476
      %1478 = vdwg.mxu0
      %v1503 = vrot.slane %v294, 1
      %v1504 = vrot.slane %v295, 1
      %v1505 = vsel %vm588, %v1503, %v1504
      %v1506 = vrot.slane %v296, 1
      %v1507 = vsel %vm588, %v1504, %v1506
      %v1508 = vrot.slane %v297, 1
      %v1509 = vrot.slane %v298, 1
      %v1510 = vsel %vm588, %v1508, %v1509
      %v1511 = vrot.slane %v299, 1
      %v1512 = vsel %vm588, %v1509, %v1511
      %v1513 = vrot.slane %v300, 1
      %v1514 = vrot.slane %v301, 1
      %v1515 = vsel %vm588, %v1513, %v1514
      %v1516 = vrot.slane %v302, 1
      %v1517 = vsel %vm588, %v1514, %v1516
      %v1518 = vrot.slane %v303, 1
      %v1519 = vrot.slane %v304, 1
      %v1520 = vsel %vm588, %v1518, %v1519
      %v1521 = vrot.slane %v305, 1
      %v1522 = vsel %vm588, %v1519, %v1521
      %v1523 = vrot.slane %v306, 1
      %v1524 = vrot.slane %v307, 1
      %v1525 = vsel %vm588, %v1523, %v1524
      %v1526 = vrot.slane %v308, 1
      %v1527 = vsel %vm588, %v1524, %v1526
      %v1528 = vrot.slane %v309, 1
      %v1529 = vrot.slane %v310, 1
      %v1530 = vsel %vm588, %v1528, %v1529
      %v1531 = vrot.slane %v311, 1
      %v1532 = vsel %vm588, %v1529, %v1531
      %v1533 = vrot.slane %v312, 1
      %v1534 = vrot.slane %v313, 1
      %v1535 = vsel %vm588, %v1533, %v1534
      %v1536 = vrot.slane %v314, 1
      %v1537 = vsel %vm588, %v1534, %v1536
      %v1538 = vrot.slane %v315, 1
      %v1539 = vrot.slane %v316, 1
      %v1540 = vsel %vm588, %v1538, %v1539
      %v1541 = vrot.slane %v317, 1
      %v1542 = vsel %vm588, %v1539, %v1541
      %v1559 = vadd.f32 %v1432, %v1505
      %v1560 = vadd.f32 %v1435, %v1507
      %v1561 = vadd.f32 %v1438, %v1510
      %v1562 = vadd.f32 %v1441, %v1512
      %v1563 = vadd.f32 %v1444, %v1515
      %v1564 = vadd.f32 %v1447, %v1517
      %v1565 = vadd.f32 %v1450, %v1520
      %v1566 = vadd.f32 %v1453, %v1522
      %v1567 = vadd.f32 %v1456, %v1525
      %v1568 = vadd.f32 %v1459, %v1527
      %v1569 = vadd.f32 %v1462, %v1530
      %v1570 = vadd.f32 %v1465, %v1532
      %v1571 = vadd.f32 %v1468, %v1535
      %v1572 = vadd.f32 %v1471, %v1537
      %v1573 = vadd.f32 %v1474, %v1540
      %v1574 = vadd.f32 %v1477, %v1542
      %1575 = vst [vmem:[%s289] sm:$0xff] %v1559
      %1576 = vst [vmem:[%s289 + $0x8] sm:$0xff] %v1560
      %1577 = vst [vmem:[%s289 + $0x10] sm:$0xff] %v1561
      %1578 = vst [vmem:[%s289 + $0x18] sm:$0xff] %v1562
      %1579 = vst [vmem:[%s289 + $0x20] sm:$0xff] %v1563
      %1580 = vst [vmem:[%s289 + $0x28] sm:$0xff] %v1564
      %1581 = vst [vmem:[%s289 + $0x30] sm:$0xff] %v1565
      %1582 = vst [vmem:[%s289 + $0x38] sm:$0xff] %v1566
      %1583 = vst [vmem:[%s289 + $0x40] sm:$0xff] %v1567
      %1584 = vst [vmem:[%s289 + $0x48] sm:$0xff] %v1568
      %1585 = vst [vmem:[%s289 + $0x50] sm:$0xff] %v1569
      %1586 = vst [vmem:[%s289 + $0x58] sm:$0xff] %v1570
      %1587 = vst [vmem:[%s289 + $0x60] sm:$0xff] %v1571
      %1588 = vst [vmem:[%s289 + $0x68] sm:$0xff] %v1572
      %1589 = vst [vmem:[%s289 + $0x70] sm:$0xff] %v1573
      %1590 = vst [vmem:[%s289 + $0x78] sm:$0xff] %v1574
      %s1591 = smul.u32 8, %s22
      %p1592 = scmp.lt.s32.totalorder %s21, 1
      %s1593 = scalar_select %p1592, %s21, 1
      %p1594 = scmp.lt.s32.totalorder %s1591, 15
      %s1595 = scalar_select %p1594, %s1591, 15
      %s1596 = smul.addr %s1595, 2
      %s1597 = smul.addr %s1593, 32
      %s1598 = sadd.s32 %s1596, %s1597
      %s1599 = smul.addr %s1598, 8
      %s1600 = scalar_lea.vmem %s6, %s1599
      // Predicated region
      $region45: #{_forward_impl.1} parent=43 // pred_check
        %p1601 = pneg %p184
      $region46: #{_forward_impl.1} parent=43 // pred_check_branch
        %1603 = sbr.rel (%p1601) target = $region48
      $region47: #{_forward_impl.1} parent=43 // pred_region
        %s1604 = smul.u32 8, %s22
      $region48: #{_forward_impl.1} parent=43 // pred_fallthru
        _
    $region44: #{_forward_impl.1} parent=5 // pred_fallthru
      _
    %p1605 = scmp.le.s32.totalorder 2, %s12
    // Predicated region
    $region49: #{_forward_impl.1} parent=5 // pred_check
      %p1606 = pneg %p1605
    $region50: #{_forward_impl.1} parent=5 // pred_check_branch
      %1608 = sbr.rel (%p1606) target = $region52
    $region51: #{_forward_impl.1} parent=5 // pred_region
      %s1609 = ssub.s32 %s12, 2
      // Predicated region
      $region53: #{_forward_impl.1} parent=51 // pred_check
        %p1610 = pneg %p190
      $region54: #{_forward_impl.1} parent=51 // pred_check_branch
        %1612 = sbr.rel (%p1610) target = $region56
      $region55: #{_forward_impl.1} parent=51 // pred_region
        %s1613 = smul.u32 8, %s24
        %p1614 = scmp.lt.s32.totalorder %s23, 1
        %s1615 = scalar_select %p1614, %s23, 1
        %p1616 = scmp.lt.s32.totalorder %s1613, 15
        %s1617 = scalar_select %p1616, %s1613, 15
        %s1618 = smul.addr %s1617, 2
        %s1619 = smul.addr %s1615, 32
        %s1620 = sadd.s32 %s1618, %s1619
        %s1621 = smul.addr %s1620, 8
        %s1622 = scalar_lea.vmem %s6, %s1621
      $region56: #{_forward_impl.1} parent=51 // pred_fallthru
        _
    $region52: #{_forward_impl.1} parent=5 // pred_fallthru
      _
  $region6: #{_forward_impl.1} parent=0 // loop_footer
    %s16 = sadd.s32 1, %s12
  $region7: #{_forward_impl.1} parent=0 // loop_footer_branch
    %11 = sbr.rel target = $region3
  $region8: #{_forward_impl.1} parent=0 // loop_exit
    _

</llo_original>
